<compile_context>
chip_gen: v7x
topology: tpu7x:2x2x1
jax: 0.10.0
libtpu: 0.0.40
codegen_flags: <defaults>
</compile_context>

<pallas_src>
import functools

import jax
import jax.numpy as jnp
from jax.experimental import pallas as pl
from jax.experimental.pallas import tpu as pltpu


def _softmax_recip(denom):
    """EUP approx reciprocal + 2 Newton steps -> ~f32-exact 1/denom."""
    r = pl.reciprocal(denom, approx=True)
    r = r * (2.0 - denom * r)
    r = r * (2.0 - denom * r)
    return r


def _mha_kernel(x_ref, wqkv_ref, wproj_ref, bproj_ref, mask_ref,
                out_ref, wei_ref, cat_ref, *, n_heads, head_size):
    """One grid step = one batch element.

    Fused QKV projection for all heads, per-head causal+padding masked softmax,
    attn @ v written into a concat scratch, then one fused bf16 output proj.
    """
    T = x_ref.shape[1]
    hs = head_size
    Hhs = n_heads * head_size

    x = x_ref[0]                               # (T, C)

    # One big MXU matmul for q, k and v of every head.  Kept in f32 so the
    # exposed attention weights stay within 1e-5 of the f32 reference.
    qkv = jnp.dot(x, wqkv_ref[...], preferred_element_type=jnp.float32)  # (T, 3*H*hs)

    # Causal + key-padding mask (shared by all heads).
    row = jax.lax.broadcasted_iota(jnp.int32, (T, T), 0)
    col = jax.lax.broadcasted_iota(jnp.int32, (T, T), 1)
    pad = mask_ref[0]                          # (1, T) padding mask
    keep = jnp.logical_and(row >= col, pad != 0.0)                    # (T, T)

    scale = jnp.float32(hs ** (-0.5))          # k.shape[-1] ** -0.5 in torch code
    neg_big = jnp.float32(-1000000000.0)       # masked_fill(-inf) then -inf -> -1e9

    # Contract on the last dim of both operands (q @ k^T without a transpose).
    dn = (((1,), (1,)), ((), ()))

    for h in range(n_heads):                   # static unroll
        qh = qkv[:, h * hs:(h + 1) * hs]                       # (T, hs)
        kh = qkv[:, Hhs + h * hs:Hhs + (h + 1) * hs]           # (T, hs)
        vh = qkv[:, 2 * Hhs + h * hs:2 * Hhs + (h + 1) * hs]   # (T, hs)

        s = jax.lax.dot_general(qh, kh, dn,
                                preferred_element_type=jnp.float32) * scale  # (T, T)
        s = jnp.where(keep, s, neg_big)

        m = jnp.max(s, axis=-1, keepdims=True)
        p = jnp.exp(s - m)
        wei = p * _softmax_recip(jnp.sum(p, axis=-1, keepdims=True))

        # Store this head's weights immediately (no stack): the vst overlaps
        # the next head's compute and nothing stays live across heads.
        wei_ref[0, h] = wei
        # dropout(wei): eval mode -> identity

        # Column-slice write into the concat scratch (replaces concatenate).
        cat_ref[:, h * hs:(h + 1) * hs] = jnp.dot(
            wei, vh, preferred_element_type=jnp.float32)       # (T, hs)

    # torch.cat(head_output, dim=-1) @ proj  -> one fused bf16 MXU matmul with
    # f32 accumulation; bias add stays f32.
    out = jnp.dot(cat_ref[...].astype(jnp.bfloat16), wproj_ref[...],
                  preferred_element_type=jnp.float32)           # (T, n_embd)
    out_ref[0] = out + bproj_ref[...]                           # bias broadcast
    # dropout(proj(out)): eval mode -> identity


def multi_head_attention(x, wq, wk, wv, wproj, bproj, attention_mask,
                         *, n_heads, head_size, n_embd):
    """x: (B, T, C) f32.
    wq/wk/wv: per-head Linear weights, torch layout (H, hs, C).
    wproj: Linear(n_heads*head_size -> n_embd) weight, torch layout (n_embd, H*hs).
    bproj: (n_embd,).
    attention_mask: (B, T) (1 = keep, 0 = masked).

    Returns (out, att_weights) with att_weights stacked as (B, H, T, T)
    (index att_weights[:, h] for the per-head (B, T, T) array).
    """
    B, T, C = x.shape
    Hhs = n_heads * head_size

    # Layout plumbing (done once, outside the kernel): fuse per-head q/k/v
    # weights into a single (C, 3*H*hs) matrix; column j of each block maps to
    # (head j // hs, dim j % hs), matching torch.cat(head_output, dim=-1).
    def _to_cols(w):                                 # (H, hs, C) -> (C, H*hs)
        return jnp.transpose(w, (2, 0, 1)).reshape(C, Hhs)

    w_qkv = jnp.concatenate(
        [_to_cols(wq), _to_cols(wk), _to_cols(wv)], axis=-1).astype(jnp.float32)
    # Output-projection weight in bf16 (native MXU dtype); accumulation is f32.
    w_proj = wproj.T.astype(jnp.bfloat16)            # (H*hs, n_embd)
    b_proj = bproj.reshape(1, n_embd).astype(jnp.float32)
    mask3 = attention_mask.reshape(B, 1, T).astype(jnp.float32)

    kernel = functools.partial(_mha_kernel, n_heads=n_heads, head_size=head_size)

    out, wei = pl.pallas_call(
        kernel,
        out_shape=(
            jax.ShapeDtypeStruct((B, T, n_embd), jnp.float32),
            jax.ShapeDtypeStruct((B, n_heads, T, T), jnp.float32),
        ),
        grid_spec=pltpu.PrefetchScalarGridSpec(
            num_scalar_prefetch=0,
            grid=(B,),
            in_specs=[
                pl.BlockSpec((1, T, C), lambda b: (b, 0, 0)),          # x (per batch)
                pl.BlockSpec((C, 3 * Hhs), lambda b: (0, 0)),          # fused qkv W (resident)
                pl.BlockSpec((Hhs, n_embd), lambda b: (0, 0)),         # proj W (resident, bf16)
                pl.BlockSpec((1, n_embd), lambda b: (0, 0)),           # proj bias (resident)
                pl.BlockSpec((1, 1, T), lambda b: (b, 0, 0)),          # padding mask
            ],
            out_specs=[
                pl.BlockSpec((1, T, n_embd), lambda b: (b, 0, 0)),     # output
                pl.BlockSpec((1, n_heads, T, T), lambda b: (b, 0, 0, 0)),  # attn weights
            ],
            scratch_shapes=[
                pltpu.VMEM((T, Hhs), jnp.float32),                     # concat scratch
            ],
        ),
        compiler_params=pltpu.CompilerParams(
            dimension_semantics=("parallel",)),      # batch axis -> TC sharding
    )(x, w_qkv, w_proj, b_proj, mask3)

    return out, wei


def _reference(x, wq, wk, wv, wproj, bproj, attention_mask, n_heads, head_size):
    B, T, C = x.shape
    tril = jnp.tril(jnp.ones((T, T), jnp.float32))
    outs, weis = [], []
    for h in range(n_heads):
        q = x @ wq[h].T
        k = x @ wk[h].T
        v = x @ wv[h].T
        s = (q @ jnp.swapaxes(k, -1, -2)) * head_size ** (-0.5)
        keep = (tril != 0)[None] & (attention_mask[:, None, :] != 0)
        s = jnp.where(keep, s, -1e9)
        w = jax.nn.softmax(s, axis=-1)
        weis.append(w)
        outs.append(w @ v)
    cat = jnp.concatenate(outs, axis=-1)             # (B, T, H*hs)
    out = cat @ wproj.T + bproj
    return out, weis


if __name__ == "__main__":
    # module hyper-parameters (small, consistent with the forward pass)
    n_heads, head_size, n_embd, block_size = 4, 8, 32, 8
    B, T = 2, block_size

    key = jax.random.PRNGKey(0)
    kx, kq, kk, kv, kp, kb = jax.random.split(key, 6)

    x = jax.random.normal(kx, (B, T, n_embd), jnp.float32)
    # per-head Linear(n_embd -> head_size, bias=False) weights, torch layout (out, in)
    wq = 0.02 * jax.random.normal(kq, (n_heads, head_size, n_embd), jnp.float32)
    wk = 0.02 * jax.random.normal(kk, (n_heads, head_size, n_embd), jnp.float32)
    wv = 0.02 * jax.random.normal(kv, (n_heads, head_size, n_embd), jnp.float32)
    # proj: Linear(n_heads*head_size -> n_embd), torch layout (out, in)
    wproj = 0.02 * jax.random.normal(kp, (n_embd, n_heads * head_size), jnp.float32)
    bproj = 0.01 * jax.random.normal(kb, (n_embd,), jnp.float32)

    # padding mask: last two positions of batch 1 are padded
    attention_mask = jnp.ones((B, T), jnp.float32).at[1, -2:].set(0.0)

    out, att_weights = multi_head_attention(
        x, wq, wk, wv, wproj, bproj, attention_mask,
        n_heads=n_heads, head_size=head_size, n_embd=n_embd)
    out = jax.block_until_ready(out)
    att_weights = jax.block_until_ready(att_weights)   # (B, H, T, T)

    ref_out, ref_weis = _reference(x, wq, wk, wv, wproj, bproj,
                                   attention_mask, n_heads, head_size)
    # Attention weights come from an all-f32 path -> tight tolerance.
    for h in range(n_heads):
        assert jnp.allclose(att_weights[:, h], ref_weis[h], atol=1e-5, rtol=1e-5)
    # Output projection uses bf16 inputs (f32 accumulate) -> relaxed tolerance.
    assert jnp.allclose(out, ref_out, atol=5e-3, rtol=5e-3)

    print("KERNEL_OK")
</pallas_src>

<mosaic_0001>
module attributes {stable_mosaic.version = 11 : i64} {
  func.func @_mha_kernel(%arg0: i32, %arg1: memref<1x8x32xf32, #tpu.memory_space<vmem>>, %arg2: memref<32x96xf32, #tpu.memory_space<vmem>>, %arg3: memref<32x32xbf16, #tpu.memory_space<vmem>>, %arg4: memref<1x32xf32, #tpu.memory_space<vmem>>, %arg5: memref<1x1x8xf32, #tpu.memory_space<vmem>>, %arg6: memref<1x8x32xf32, #tpu.memory_space<vmem>>, %arg7: memref<1x4x8x8xf32, #tpu.memory_space<vmem>>, %arg8: memref<8x32xf32, #tpu.memory_space<vmem>>) attributes {dimension_semantics = [#tpu.dimension_semantics<parallel>], iteration_bounds = array<i64: 2>, scalar_prefetch = 0 : i64, scratch_operands = 1 : i64, tpu.core_type = #tpu.core_type<tc>, window_params = [{transform_indices = @transform_0, window_bounds = array<i64: 1, 8, 32>}, {pipeline_mode = #tpu.pipeline_mode<synchronous>, transform_indices = @transform_1, window_bounds = array<i64: 32, 96>}, {pipeline_mode = #tpu.pipeline_mode<synchronous>, transform_indices = @transform_2, window_bounds = array<i64: 32, 32>}, {pipeline_mode = #tpu.pipeline_mode<synchronous>, transform_indices = @transform_3, window_bounds = array<i64: 1, 32>}, {transform_indices = @transform_4, window_bounds = array<i64: 1, 1, 8>}, {transform_indices = @transform_5, window_bounds = array<i64: 1, 8, 32>}, {transform_indices = @transform_6, window_bounds = array<i64: 1, 4, 8, 8>}]} {
    %c0 = arith.constant 0 : index
    %c0_0 = arith.constant 0 : index
    %c0_1 = arith.constant 0 : index
    %0 = vector.load %arg1[%c0, %c0_0, %c0_1] : memref<1x8x32xf32, #tpu.memory_space<vmem>>, vector<1x8x32xf32>
    %1 = vector.shape_cast %0 : vector<1x8x32xf32> to vector<8x32xf32>
    %c0_2 = arith.constant 0 : index
    %c0_3 = arith.constant 0 : index
    %2 = vector.load %arg2[%c0_2, %c0_3] : memref<32x96xf32, #tpu.memory_space<vmem>>, vector<32x96xf32>
    %cst = arith.constant dense<0.000000e+00> : vector<8x96xf32>
    %3 = tpu.matmul %1, %2, %cst {dimension_numbers = #tpu.dot_dimension_numbers<[1], [0], [0], [1], [0, 0, 1, 1], [], []>} : vector<8x32xf32>, vector<32x96xf32>, vector<8x96xf32> -> vector<8x96xf32>
    %4 = tpu.iota {dimensions = array<i32: 0>} : vector<8x8xi32>
    %5 = tpu.iota {dimensions = array<i32: 1>} : vector<8x8xi32>
    %c0_4 = arith.constant 0 : index
    %c0_5 = arith.constant 0 : index
    %c0_6 = arith.constant 0 : index
    %6 = vector.load %arg5[%c0_4, %c0_5, %c0_6] : memref<1x1x8xf32, #tpu.memory_space<vmem>>, vector<1x1x8xf32>
    %7 = vector.shape_cast %6 : vector<1x1x8xf32> to vector<1x8xf32>
    %8 = arith.cmpi sge, %4, %5 : vector<8x8xi32>
    %cst_7 = arith.constant 0.000000e+00 : f32
    %9 = vector.broadcast %cst_7 : f32 to vector<1x8xf32>
    %10 = arith.cmpf one, %7, %9 : vector<1x8xf32>
    %11 = vector.broadcast %10 : vector<1x8xi1> to vector<8x8xi1>
    %12 = arith.andi %8, %11 : vector<8x8xi1>
    %13 = vector.extract_strided_slice %3 {offsets = [0, 0], sizes = [8, 8], strides = [1, 1]} : vector<8x96xf32> to vector<8x8xf32>
    %14 = vector.extract_strided_slice %3 {offsets = [0, 32], sizes = [8, 8], strides = [1, 1]} : vector<8x96xf32> to vector<8x8xf32>
    %15 = vector.extract_strided_slice %3 {offsets = [0, 64], sizes = [8, 8], strides = [1, 1]} : vector<8x96xf32> to vector<8x8xf32>
    %cst_8 = arith.constant dense<0.000000e+00> : vector<8x8xf32>
    %16 = tpu.matmul %13, %14, %cst_8 {dimension_numbers = #tpu.dot_dimension_numbers<[1], [1], [0], [0], [0, 0, 1, 0], [], []>} : vector<8x8xf32>, vector<8x8xf32>, vector<8x8xf32> -> vector<8x8xf32>
    %cst_9 = arith.constant 0.353553385 : f32
    %17 = vector.broadcast %cst_9 : f32 to vector<8x8xf32>
    %18 = arith.mulf %16, %17 : vector<8x8xf32>
    %cst_10 = arith.constant -1.000000e+09 : f32
    %19 = vector.broadcast %cst_10 : f32 to vector<8x8xf32>
    %20 = arith.select %12, %18, %19 : vector<8x8xi1>, vector<8x8xf32>
    %cst_11 = arith.constant dense<0xFF800000> : vector<8xf32>
    %21 = vector.multi_reduction <maximumf>, %20, %cst_11 [1] : vector<8x8xf32> to vector<8xf32>
    %22 = vector.shape_cast %21 : vector<8xf32> to vector<8x1xf32>
    %23 = vector.broadcast %22 : vector<8x1xf32> to vector<8x8xf32>
    %24 = arith.subf %20, %23 : vector<8x8xf32>
    %25 = math.exp %24 : vector<8x8xf32>
    %cst_12 = arith.constant dense<0.000000e+00> : vector<8xf32>
    %26 = vector.multi_reduction <add>, %25, %cst_12 [1] : vector<8x8xf32> to vector<8xf32>
    %27 = vector.shape_cast %26 : vector<8xf32> to vector<8x1xf32>
    %28 = tpu.reciprocal %27 {approx = true} : vector<8x1xf32> -> vector<8x1xf32>
    %29 = arith.mulf %27, %28 : vector<8x1xf32>
    %cst_13 = arith.constant 2.000000e+00 : f32
    %30 = vector.broadcast %cst_13 : f32 to vector<8x1xf32>
    %31 = arith.subf %30, %29 : vector<8x1xf32>
    %32 = arith.mulf %28, %31 : vector<8x1xf32>
    %33 = arith.mulf %27, %32 : vector<8x1xf32>
    %cst_14 = arith.constant 2.000000e+00 : f32
    %34 = vector.broadcast %cst_14 : f32 to vector<8x1xf32>
    %35 = arith.subf %34, %33 : vector<8x1xf32>
    %36 = arith.mulf %32, %35 : vector<8x1xf32>
    %37 = vector.broadcast %36 : vector<8x1xf32> to vector<8x8xf32>
    %38 = arith.mulf %25, %37 : vector<8x8xf32>
    %c0_15 = arith.constant 0 : index
    %c0_16 = arith.constant 0 : index
    %c0_17 = arith.constant 0 : index
    %c0_18 = arith.constant 0 : index
    %39 = vector.load %arg7[%c0_15, %c0_16, %c0_17, %c0_18] : memref<1x4x8x8xf32, #tpu.memory_space<vmem>>, vector<1x1x8x8xf32>
    %40 = vector.shape_cast %39 : vector<1x1x8x8xf32> to vector<8x8xf32>
    %41 = vector.shape_cast %38 : vector<8x8xf32> to vector<1x1x8x8xf32>
    tpu.vector_store %arg7[%c0_15, %c0_16, %c0_17, %c0_18], %41 {strides = array<i32>} : memref<1x4x8x8xf32, #tpu.memory_space<vmem>>, vector<1x1x8x8xf32>,
    %cst_19 = arith.constant dense<0.000000e+00> : vector<8x8xf32>
    %42 = tpu.matmul %38, %15, %cst_19 {dimension_numbers = #tpu.dot_dimension_numbers<[1], [0], [0], [1], [0, 0, 1, 1], [], []>} : vector<8x8xf32>, vector<8x8xf32>, vector<8x8xf32> -> vector<8x8xf32>
    %c0_20 = arith.constant 0 : index
    %c0_21 = arith.constant 0 : index
    %43 = vector.load %arg8[%c0_20, %c0_21] : memref<8x32xf32, #tpu.memory_space<vmem>>, vector<8x8xf32>
    tpu.vector_store %arg8[%c0_20, %c0_21], %42 {strides = array<i32>} : memref<8x32xf32, #tpu.memory_space<vmem>>, vector<8x8xf32>,
    %44 = vector.extract_strided_slice %3 {offsets = [0, 8], sizes = [8, 8], strides = [1, 1]} : vector<8x96xf32> to vector<8x8xf32>
    %45 = vector.extract_strided_slice %3 {offsets = [0, 40], sizes = [8, 8], strides = [1, 1]} : vector<8x96xf32> to vector<8x8xf32>
    %46 = vector.extract_strided_slice %3 {offsets = [0, 72], sizes = [8, 8], strides = [1, 1]} : vector<8x96xf32> to vector<8x8xf32>
    %cst_22 = arith.constant dense<0.000000e+00> : vector<8x8xf32>
    %47 = tpu.matmul %44, %45, %cst_22 {dimension_numbers = #tpu.dot_dimension_numbers<[1], [1], [0], [0], [0, 0, 1, 0], [], []>} : vector<8x8xf32>, vector<8x8xf32>, vector<8x8xf32> -> vector<8x8xf32>
    %cst_23 = arith.constant 0.353553385 : f32
    %48 = vector.broadcast %cst_23 : f32 to vector<8x8xf32>
    %49 = arith.mulf %47, %48 : vector<8x8xf32>
    %cst_24 = arith.constant -1.000000e+09 : f32
    %50 = vector.broadcast %cst_24 : f32 to vector<8x8xf32>
    %51 = arith.select %12, %49, %50 : vector<8x8xi1>, vector<8x8xf32>
    %cst_25 = arith.constant dense<0xFF800000> : vector<8xf32>
    %52 = vector.multi_reduction <maximumf>, %51, %cst_25 [1] : vector<8x8xf32> to vector<8xf32>
    %53 = vector.shape_cast %52 : vector<8xf32> to vector<8x1xf32>
    %54 = vector.broadcast %53 : vector<8x1xf32> to vector<8x8xf32>
    %55 = arith.subf %51, %54 : vector<8x8xf32>
    %56 = math.exp %55 : vector<8x8xf32>
    %cst_26 = arith.constant dense<0.000000e+00> : vector<8xf32>
    %57 = vector.multi_reduction <add>, %56, %cst_26 [1] : vector<8x8xf32> to vector<8xf32>
    %58 = vector.shape_cast %57 : vector<8xf32> to vector<8x1xf32>
    %59 = tpu.reciprocal %58 {approx = true} : vector<8x1xf32> -> vector<8x1xf32>
    %60 = arith.mulf %58, %59 : vector<8x1xf32>
    %cst_27 = arith.constant 2.000000e+00 : f32
    %61 = vector.broadcast %cst_27 : f32 to vector<8x1xf32>
    %62 = arith.subf %61, %60 : vector<8x1xf32>
    %63 = arith.mulf %59, %62 : vector<8x1xf32>
    %64 = arith.mulf %58, %63 : vector<8x1xf32>
    %cst_28 = arith.constant 2.000000e+00 : f32
    %65 = vector.broadcast %cst_28 : f32 to vector<8x1xf32>
    %66 = arith.subf %65, %64 : vector<8x1xf32>
    %67 = arith.mulf %63, %66 : vector<8x1xf32>
    %68 = vector.broadcast %67 : vector<8x1xf32> to vector<8x8xf32>
    %69 = arith.mulf %56, %68 : vector<8x8xf32>
    %c0_29 = arith.constant 0 : index
    %c1 = arith.constant 1 : index
    %c0_30 = arith.constant 0 : index
    %c0_31 = arith.constant 0 : index
    %70 = vector.load %arg7[%c0_29, %c1, %c0_30, %c0_31] : memref<1x4x8x8xf32, #tpu.memory_space<vmem>>, vector<1x1x8x8xf32>
    %71 = vector.shape_cast %70 : vector<1x1x8x8xf32> to vector<8x8xf32>
    %72 = vector.shape_cast %69 : vector<8x8xf32> to vector<1x1x8x8xf32>
    tpu.vector_store %arg7[%c0_29, %c1, %c0_30, %c0_31], %72 {strides = array<i32>} : memref<1x4x8x8xf32, #tpu.memory_space<vmem>>, vector<1x1x8x8xf32>,
    %cst_32 = arith.constant dense<0.000000e+00> : vector<8x8xf32>
    %73 = tpu.matmul %69, %46, %cst_32 {dimension_numbers = #tpu.dot_dimension_numbers<[1], [0], [0], [1], [0, 0, 1, 1], [], []>} : vector<8x8xf32>, vector<8x8xf32>, vector<8x8xf32> -> vector<8x8xf32>
    %c0_33 = arith.constant 0 : index
    %c8 = arith.constant 8 : index
    %74 = vector.load %arg8[%c0_33, %c8] : memref<8x32xf32, #tpu.memory_space<vmem>>, vector<8x8xf32>
    tpu.vector_store %arg8[%c0_33, %c8], %73 {strides = array<i32>} : memref<8x32xf32, #tpu.memory_space<vmem>>, vector<8x8xf32>,
    %75 = vector.extract_strided_slice %3 {offsets = [0, 16], sizes = [8, 8], strides = [1, 1]} : vector<8x96xf32> to vector<8x8xf32>
    %76 = vector.extract_strided_slice %3 {offsets = [0, 48], sizes = [8, 8], strides = [1, 1]} : vector<8x96xf32> to vector<8x8xf32>
    %77 = vector.extract_strided_slice %3 {offsets = [0, 80], sizes = [8, 8], strides = [1, 1]} : vector<8x96xf32> to vector<8x8xf32>
    %cst_34 = arith.constant dense<0.000000e+00> : vector<8x8xf32>
    %78 = tpu.matmul %75, %76, %cst_34 {dimension_numbers = #tpu.dot_dimension_numbers<[1], [1], [0], [0], [0, 0, 1, 0], [], []>} : vector<8x8xf32>, vector<8x8xf32>, vector<8x8xf32> -> vector<8x8xf32>
    %cst_35 = arith.constant 0.353553385 : f32
    %79 = vector.broadcast %cst_35 : f32 to vector<8x8xf32>
    %80 = arith.mulf %78, %79 : vector<8x8xf32>
    %cst_36 = arith.constant -1.000000e+09 : f32
    %81 = vector.broadcast %cst_36 : f32 to vector<8x8xf32>
    %82 = arith.select %12, %80, %81 : vector<8x8xi1>, vector<8x8xf32>
    %cst_37 = arith.constant dense<0xFF800000> : vector<8xf32>
    %83 = vector.multi_reduction <maximumf>, %82, %cst_37 [1] : vector<8x8xf32> to vector<8xf32>
    %84 = vector.shape_cast %83 : vector<8xf32> to vector<8x1xf32>
    %85 = vector.broadcast %84 : vector<8x1xf32> to vector<8x8xf32>
    %86 = arith.subf %82, %85 : vector<8x8xf32>
    %87 = math.exp %86 : vector<8x8xf32>
    %cst_38 = arith.constant dense<0.000000e+00> : vector<8xf32>
    %88 = vector.multi_reduction <add>, %87, %cst_38 [1] : vector<8x8xf32> to vector<8xf32>
    %89 = vector.shape_cast %88 : vector<8xf32> to vector<8x1xf32>
    %90 = tpu.reciprocal %89 {approx = true} : vector<8x1xf32> -> vector<8x1xf32>
    %91 = arith.mulf %89, %90 : vector<8x1xf32>
    %cst_39 = arith.constant 2.000000e+00 : f32
    %92 = vector.broadcast %cst_39 : f32 to vector<8x1xf32>
    %93 = arith.subf %92, %91 : vector<8x1xf32>
    %94 = arith.mulf %90, %93 : vector<8x1xf32>
    %95 = arith.mulf %89, %94 : vector<8x1xf32>
    %cst_40 = arith.constant 2.000000e+00 : f32
    %96 = vector.broadcast %cst_40 : f32 to vector<8x1xf32>
    %97 = arith.subf %96, %95 : vector<8x1xf32>
    %98 = arith.mulf %94, %97 : vector<8x1xf32>
    %99 = vector.broadcast %98 : vector<8x1xf32> to vector<8x8xf32>
    %100 = arith.mulf %87, %99 : vector<8x8xf32>
    %c0_41 = arith.constant 0 : index
    %c2 = arith.constant 2 : index
    %c0_42 = arith.constant 0 : index
    %c0_43 = arith.constant 0 : index
    %101 = vector.load %arg7[%c0_41, %c2, %c0_42, %c0_43] : memref<1x4x8x8xf32, #tpu.memory_space<vmem>>, vector<1x1x8x8xf32>
    %102 = vector.shape_cast %101 : vector<1x1x8x8xf32> to vector<8x8xf32>
    %103 = vector.shape_cast %100 : vector<8x8xf32> to vector<1x1x8x8xf32>
    tpu.vector_store %arg7[%c0_41, %c2, %c0_42, %c0_43], %103 {strides = array<i32>} : memref<1x4x8x8xf32, #tpu.memory_space<vmem>>, vector<1x1x8x8xf32>,
    %cst_44 = arith.constant dense<0.000000e+00> : vector<8x8xf32>
    %104 = tpu.matmul %100, %77, %cst_44 {dimension_numbers = #tpu.dot_dimension_numbers<[1], [0], [0], [1], [0, 0, 1, 1], [], []>} : vector<8x8xf32>, vector<8x8xf32>, vector<8x8xf32> -> vector<8x8xf32>
    %c0_45 = arith.constant 0 : index
    %c16 = arith.constant 16 : index
    %105 = vector.load %arg8[%c0_45, %c16] : memref<8x32xf32, #tpu.memory_space<vmem>>, vector<8x8xf32>
    tpu.vector_store %arg8[%c0_45, %c16], %104 {strides = array<i32>} : memref<8x32xf32, #tpu.memory_space<vmem>>, vector<8x8xf32>,
    %106 = vector.extract_strided_slice %3 {offsets = [0, 24], sizes = [8, 8], strides = [1, 1]} : vector<8x96xf32> to vector<8x8xf32>
    %107 = vector.extract_strided_slice %3 {offsets = [0, 56], sizes = [8, 8], strides = [1, 1]} : vector<8x96xf32> to vector<8x8xf32>
    %108 = vector.extract_strided_slice %3 {offsets = [0, 88], sizes = [8, 8], strides = [1, 1]} : vector<8x96xf32> to vector<8x8xf32>
    %cst_46 = arith.constant dense<0.000000e+00> : vector<8x8xf32>
    %109 = tpu.matmul %106, %107, %cst_46 {dimension_numbers = #tpu.dot_dimension_numbers<[1], [1], [0], [0], [0, 0, 1, 0], [], []>} : vector<8x8xf32>, vector<8x8xf32>, vector<8x8xf32> -> vector<8x8xf32>
    %cst_47 = arith.constant 0.353553385 : f32
    %110 = vector.broadcast %cst_47 : f32 to vector<8x8xf32>
    %111 = arith.mulf %109, %110 : vector<8x8xf32>
    %cst_48 = arith.constant -1.000000e+09 : f32
    %112 = vector.broadcast %cst_48 : f32 to vector<8x8xf32>
    %113 = arith.select %12, %111, %112 : vector<8x8xi1>, vector<8x8xf32>
    %cst_49 = arith.constant dense<0xFF800000> : vector<8xf32>
    %114 = vector.multi_reduction <maximumf>, %113, %cst_49 [1] : vector<8x8xf32> to vector<8xf32>
    %115 = vector.shape_cast %114 : vector<8xf32> to vector<8x1xf32>
    %116 = vector.broadcast %115 : vector<8x1xf32> to vector<8x8xf32>
    %117 = arith.subf %113, %116 : vector<8x8xf32>
    %118 = math.exp %117 : vector<8x8xf32>
    %cst_50 = arith.constant dense<0.000000e+00> : vector<8xf32>
    %119 = vector.multi_reduction <add>, %118, %cst_50 [1] : vector<8x8xf32> to vector<8xf32>
    %120 = vector.shape_cast %119 : vector<8xf32> to vector<8x1xf32>
    %121 = tpu.reciprocal %120 {approx = true} : vector<8x1xf32> -> vector<8x1xf32>
    %122 = arith.mulf %120, %121 : vector<8x1xf32>
    %cst_51 = arith.constant 2.000000e+00 : f32
    %123 = vector.broadcast %cst_51 : f32 to vector<8x1xf32>
    %124 = arith.subf %123, %122 : vector<8x1xf32>
    %125 = arith.mulf %121, %124 : vector<8x1xf32>
    %126 = arith.mulf %120, %125 : vector<8x1xf32>
    %cst_52 = arith.constant 2.000000e+00 : f32
    %127 = vector.broadcast %cst_52 : f32 to vector<8x1xf32>
    %128 = arith.subf %127, %126 : vector<8x1xf32>
    %129 = arith.mulf %125, %128 : vector<8x1xf32>
    %130 = vector.broadcast %129 : vector<8x1xf32> to vector<8x8xf32>
    %131 = arith.mulf %118, %130 : vector<8x8xf32>
    %c0_53 = arith.constant 0 : index
    %c3 = arith.constant 3 : index
    %c0_54 = arith.constant 0 : index
    %c0_55 = arith.constant 0 : index
    %132 = vector.load %arg7[%c0_53, %c3, %c0_54, %c0_55] : memref<1x4x8x8xf32, #tpu.memory_space<vmem>>, vector<1x1x8x8xf32>
    %133 = vector.shape_cast %132 : vector<1x1x8x8xf32> to vector<8x8xf32>
    %134 = vector.shape_cast %131 : vector<8x8xf32> to vector<1x1x8x8xf32>
    tpu.vector_store %arg7[%c0_53, %c3, %c0_54, %c0_55], %134 {strides = array<i32>} : memref<1x4x8x8xf32, #tpu.memory_space<vmem>>, vector<1x1x8x8xf32>,
    %cst_56 = arith.constant dense<0.000000e+00> : vector<8x8xf32>
    %135 = tpu.matmul %131, %108, %cst_56 {dimension_numbers = #tpu.dot_dimension_numbers<[1], [0], [0], [1], [0, 0, 1, 1], [], []>} : vector<8x8xf32>, vector<8x8xf32>, vector<8x8xf32> -> vector<8x8xf32>
    %c0_57 = arith.constant 0 : index
    %c24 = arith.constant 24 : index
    %136 = vector.load %arg8[%c0_57, %c24] : memref<8x32xf32, #tpu.memory_space<vmem>>, vector<8x8xf32>
    tpu.vector_store %arg8[%c0_57, %c24], %135 {strides = array<i32>} : memref<8x32xf32, #tpu.memory_space<vmem>>, vector<8x8xf32>,
    %c0_58 = arith.constant 0 : index
    %c0_59 = arith.constant 0 : index
    %137 = vector.load %arg8[%c0_58, %c0_59] : memref<8x32xf32, #tpu.memory_space<vmem>>, vector<8x32xf32>
    %138 = arith.truncf %137 : vector<8x32xf32> to vector<8x32xbf16>
    %c0_60 = arith.constant 0 : index
    %c0_61 = arith.constant 0 : index
    %139 = vector.load %arg3[%c0_60, %c0_61] : memref<32x32xbf16, #tpu.memory_space<vmem>>, vector<32x32xbf16>
    %cst_62 = arith.constant dense<0.000000e+00> : vector<8x32xf32>
    %140 = tpu.matmul %138, %139, %cst_62 {dimension_numbers = #tpu.dot_dimension_numbers<[1], [0], [0], [1], [0, 0, 1, 1], [], []>} : vector<8x32xbf16>, vector<32x32xbf16>, vector<8x32xf32> -> vector<8x32xf32>
    %c0_63 = arith.constant 0 : index
    %c0_64 = arith.constant 0 : index
    %141 = vector.load %arg4[%c0_63, %c0_64] : memref<1x32xf32, #tpu.memory_space<vmem>>, vector<1x32xf32>
    %142 = vector.broadcast %141 : vector<1x32xf32> to vector<8x32xf32>
    %143 = arith.addf %140, %142 : vector<8x32xf32>
    %c0_65 = arith.constant 0 : index
    %c0_66 = arith.constant 0 : index
    %c0_67 = arith.constant 0 : index
    %144 = vector.load %arg6[%c0_65, %c0_66, %c0_67] : memref<1x8x32xf32, #tpu.memory_space<vmem>>, vector<1x8x32xf32>
    %145 = vector.shape_cast %144 : vector<1x8x32xf32> to vector<8x32xf32>
    %146 = vector.shape_cast %143 : vector<8x32xf32> to vector<1x8x32xf32>
    tpu.vector_store %arg6[%c0_65, %c0_66, %c0_67], %146 {strides = array<i32>} : memref<1x8x32xf32, #tpu.memory_space<vmem>>, vector<1x8x32xf32>,
    return
  }
  func.func @transform_0(%arg0: i32) -> (i32, i32, i32) {
    %c0_i32 = arith.constant 0 : i32
    %c0_i32_0 = arith.constant 0 : i32
    %c0_i32_1 = arith.constant 0 : i32
    return %arg0, %c0_i32, %c0_i32_0 : i32, i32, i32
  }
  func.func @transform_1(%arg0: i32) -> (i32, i32) {
    %c0_i32 = arith.constant 0 : i32
    %c0_i32_0 = arith.constant 0 : i32
    %c0_i32_1 = arith.constant 0 : i32
    return %c0_i32, %c0_i32_0 : i32, i32
  }
  func.func @transform_2(%arg0: i32) -> (i32, i32) {
    %c0_i32 = arith.constant 0 : i32
    %c0_i32_0 = arith.constant 0 : i32
    %c0_i32_1 = arith.constant 0 : i32
    return %c0_i32, %c0_i32_0 : i32, i32
  }
  func.func @transform_3(%arg0: i32) -> (i32, i32) {
    %c0_i32 = arith.constant 0 : i32
    %c0_i32_0 = arith.constant 0 : i32
    %c0_i32_1 = arith.constant 0 : i32
    return %c0_i32, %c0_i32_0 : i32, i32
  }
  func.func @transform_4(%arg0: i32) -> (i32, i32, i32) {
    %c0_i32 = arith.constant 0 : i32
    %c0_i32_0 = arith.constant 0 : i32
    %c0_i32_1 = arith.constant 0 : i32
    return %arg0, %c0_i32, %c0_i32_0 : i32, i32, i32
  }
  func.func @transform_5(%arg0: i32) -> (i32, i32, i32) {
    %c0_i32 = arith.constant 0 : i32
    %c0_i32_0 = arith.constant 0 : i32
    %c0_i32_1 = arith.constant 0 : i32
    return %arg0, %c0_i32, %c0_i32_0 : i32, i32, i32
  }
  func.func @transform_6(%arg0: i32) -> (i32, i32, i32, i32) {
    %c0_i32 = arith.constant 0 : i32
    %c0_i32_0 = arith.constant 0 : i32
    %c0_i32_1 = arith.constant 0 : i32
    %c0_i32_2 = arith.constant 0 : i32
    return %arg0, %c0_i32, %c0_i32_0, %c0_i32_1 : i32, i32, i32, i32
  }
}

</mosaic_0001>

<llo_original>
// kernel: tpu_custom_call.1
$region0: #{tpu_custom_call.1}
  #allocation0 [shape = 'u32[]', space=smem, size = 0x4, offset = 0x4, fixed_abs, tag = 'smem constant byte address 0x4 - core index']
  #allocation1 [shape = 'u32[144,128]{1,0:T(1,128)}', space=vmem, size = 0x12000, scoped, tag = 'internal scratch']
  #allocation2 [shape = 'f32[8,32]{1,0:T(8,128)}', space=vmem, size = 0x1000, scoped, tag = 'scratch operand']
  %s0 = inlined_call_operand.hbm [shape: f32[2,8,32], index: 0, kind: input, shape index: {}]
  %s1 = inlined_call_operand.hbm [shape: f32[32,96], index: 1, kind: input, shape index: {}]
  %s2 = inlined_call_operand.hbm [shape: bf16[32,32], index: 2, kind: input, shape index: {}]
  %s3 = inlined_call_operand.vmem [shape: f32[1,32], index: 3, kind: input, shape index: {}]
  %s4 = inlined_call_operand.vmem [shape: f32[2,1,8], index: 4, kind: input, shape index: {}]
  %s5 = inlined_call_operand.hbm [shape: f32[2,8,32], index: 5, kind: output, shape index: {0}]
  %s6 = inlined_call_operand.hbm [shape: f32[2,4,8,8], index: 6, kind: output, shape index: {1}]
  %7 = xla_tuple %s5, %s6
  %s8 = sld [smem:[#allocation0]]
  $region73: #{tpu_custom_call.1} parent=0
    _
  %s10 = ssub.s32 1, %s8
  %s11 = scalar_select 0, %s10, %s8
  $region1: #{tpu_custom_call.1} parent=0
    #allocation3 [shape = 'u8[8192]{0}', space=vmem, size = 0x2000, scoped, tag = 'input window, operand 0']
    #allocation4 [shape = 's32[2]{0}', space=sflag, size = 0x8, scoped, tag = 'scoped memory for tpu_custom_call.1']
    #allocation5 [shape = 's32[2]{0}', space=sflag, size = 0x8, scoped, tag = 'scoped memory for tpu_custom_call.1']
    #allocation6 [shape = 'u8[16384]{0}', space=vmem, size = 0x4000, scoped, tag = 'input window, operand 1, single buffered']
    #allocation7 [shape = 's32[1]{0}', space=sflag, size = 0x4, scoped, tag = 'scoped memory for tpu_custom_call.1']
    #allocation8 [shape = 'u8[8192]{0}', space=vmem, size = 0x2000, scoped, tag = 'input window, operand 2, single buffered']
    #allocation9 [shape = 'u8[8192]{0}', space=vmem, size = 0x2000, scoped, tag = 'output window, operand 0']
    #allocation10 [shape = 'u8[32768]{0}', space=vmem, size = 0x8000, scoped, tag = 'output window, operand 1']
    #allocation11 [shape = 's32[2]{0}', space=sflag, size = 0x8, scoped, tag = 'scoped memory for tpu_custom_call.1']
    %12 = vsyncpa [#allocation4], 0
    %s13 = scalar_lea.sflag [#allocation4], 1
    %14 = vsyncpa %s13, 0
    %15 = vsyncpa [#allocation7], 0
    %16 = vsyncpa [#allocation5], 0
    %s17 = scalar_lea.sflag [#allocation5], 1
    %18 = vsyncpa %s17, 0
    %19 = vsyncpa [#allocation11], 0
    %s20 = scalar_lea.sflag [#allocation11], 1
    %21 = vsyncpa %s20, 0
    loop: start=0, step=1, limit=4
    $region2: #{tpu_custom_call.1} parent=1 // loop_pre_header
      _
    $region3: #{tpu_custom_call.1} parent=1 // loop_header
      %s23 = sphi 0, %s27
      %p24 = scmp.ge.s32.totalorder %s23, 4
      %s33 = sphi 0, %s35
      %s36 = sphi 0, %s33
      %s37 = sphi 0, %s36
      %s53 = sphi 0, %s37
      %s57 = sphi 0, %s57
      %s59 = sphi 0, %s57
      %s60 = sphi 0, %s59
      %s74 = sphi 0, %s60
      %s78 = sphi 0, %s78
      %s80 = sphi 0, %s78
      %s81 = sphi 0, %s80
      %s95 = sphi 0, %s81
      %s99 = sphi 0, %s99
      %s101 = sphi 0, %s99
      %s102 = sphi 0, %s101
      %s116 = sphi 0, %s102
      %s122 = sphi 0, %s124
      %s125 = sphi 0, %s122
      %s126 = sphi 0, %s125
      %s142 = sphi 0, %s126
      %s148 = sphi 0, %s150
      %s151 = sphi 0, %s148
      %s152 = sphi 0, %s151
      %s168 = sphi 0, %s152
      %s174 = sphi 0, %s176
      %s177 = sphi 0, %s174
      %s178 = sphi 0, %s177
      %s194 = sphi 0, %s178
    $region4: #{tpu_custom_call.1} parent=1 // loop_header_branch
      %26 = sbr.rel (%p24) target = $region8
    $region5: #{tpu_custom_call.1} parent=1 // loop_body
      %s28 = ssub.s32 %s23, 1
      %s29 = ssub.s32 %s23, 2
      %s30 = sadd.s32 %s23, 1
      %s31 = ssub.s32 %s23, %s30
      %p32 = scmp.eq.s32.totalorder %s31, 0
      %s34 = sadd.s32 %s33, 1
      %s35 = scalar_select %p32, %s33, %s34
      %p38 = pneg %p32
      %p39 = scmp.eq.s32.totalorder %s23, 1
      %p40 = por %p38, %p39
      %p41 = scmp.ne.s32.totalorder %s33, %s36
      %p42 = scmp.eq.s32.totalorder %s23, 0
      %p43 = por %p41, %p42
      %p44 = scmp.ne.s32.totalorder %s33, %s36
      %p45 = scmp.eq.s32.totalorder %s28, 1
      %p46 = por %p44, %p45
      %p47 = scmp.ne.s32.totalorder %s36, %s37
      %p48 = scmp.eq.s32.totalorder %s28, 0
      %p49 = por %p47, %p48
      %p50 = scmp.ne.s32.totalorder %s36, %s37
      %p51 = scmp.eq.s32.totalorder %s29, 1
      %p52 = por %p50, %p51
      %p54 = scmp.ne.s32.totalorder %s37, %s53
      %p55 = scmp.eq.s32.totalorder %s29, 0
      %p56 = por %p54, %p55
      %s58 = sadd.s32 %s57, 1
      %p61 = scmp.eq.s32.totalorder %s23, 1
      %p62 = scmp.ne.s32.totalorder %s57, %s59
      %p63 = scmp.eq.s32.totalorder %s23, 0
      %p64 = por %p62, %p63
      %p65 = scmp.ne.s32.totalorder %s57, %s59
      %p66 = scmp.eq.s32.totalorder %s28, 1
      %p67 = por %p65, %p66
      %p68 = scmp.ne.s32.totalorder %s59, %s60
      %p69 = scmp.eq.s32.totalorder %s28, 0
      %p70 = por %p68, %p69
      %p71 = scmp.ne.s32.totalorder %s59, %s60
      %p72 = scmp.eq.s32.totalorder %s29, 1
      %p73 = por %p71, %p72
      %p75 = scmp.ne.s32.totalorder %s60, %s74
      %p76 = scmp.eq.s32.totalorder %s29, 0
      %p77 = por %p75, %p76
      %s79 = sadd.s32 %s78, 1
      %p82 = scmp.eq.s32.totalorder %s23, 1
      %p83 = scmp.ne.s32.totalorder %s78, %s80
      %p84 = scmp.eq.s32.totalorder %s23, 0
      %p85 = por %p83, %p84
      %p86 = scmp.ne.s32.totalorder %s78, %s80
      %p87 = scmp.eq.s32.totalorder %s28, 1
      %p88 = por %p86, %p87
      %p89 = scmp.ne.s32.totalorder %s80, %s81
      %p90 = scmp.eq.s32.totalorder %s28, 0
      %p91 = por %p89, %p90
      %p92 = scmp.ne.s32.totalorder %s80, %s81
      %p93 = scmp.eq.s32.totalorder %s29, 1
      %p94 = por %p92, %p93
      %p96 = scmp.ne.s32.totalorder %s81, %s95
      %p97 = scmp.eq.s32.totalorder %s29, 0
      %p98 = por %p96, %p97
      %s100 = sadd.s32 %s99, 1
      %p103 = scmp.eq.s32.totalorder %s23, 1
      %p104 = scmp.ne.s32.totalorder %s99, %s101
      %p105 = scmp.eq.s32.totalorder %s23, 0
      %p106 = por %p104, %p105
      %p107 = scmp.ne.s32.totalorder %s99, %s101
      %p108 = scmp.eq.s32.totalorder %s28, 1
      %p109 = por %p107, %p108
      %p110 = scmp.ne.s32.totalorder %s101, %s102
      %p111 = scmp.eq.s32.totalorder %s28, 0
      %p112 = por %p110, %p111
      %p113 = scmp.ne.s32.totalorder %s101, %s102
      %p114 = scmp.eq.s32.totalorder %s29, 1
      %p115 = por %p113, %p114
      %p117 = scmp.ne.s32.totalorder %s102, %s116
      %p118 = scmp.eq.s32.totalorder %s29, 0
      %p119 = por %p117, %p118
      %s120 = ssub.s32 %s23, %s30
      %p121 = scmp.eq.s32.totalorder %s120, 0
      %s123 = sadd.s32 %s122, 1
      %s124 = scalar_select %p121, %s122, %s123
      %p127 = pneg %p121
      %p128 = scmp.eq.s32.totalorder %s23, 1
      %p129 = por %p127, %p128
      %p130 = scmp.ne.s32.totalorder %s122, %s125
      %p131 = scmp.eq.s32.totalorder %s23, 0
      %p132 = por %p130, %p131
      %p133 = scmp.ne.s32.totalorder %s122, %s125
      %p134 = scmp.eq.s32.totalorder %s28, 1
      %p135 = por %p133, %p134
      %p136 = scmp.ne.s32.totalorder %s125, %s126
      %p137 = scmp.eq.s32.totalorder %s28, 0
      %p138 = por %p136, %p137
      %p139 = scmp.ne.s32.totalorder %s125, %s126
      %p140 = scmp.eq.s32.totalorder %s29, 1
      %p141 = por %p139, %p140
      %p143 = scmp.ne.s32.totalorder %s126, %s142
      %p144 = scmp.eq.s32.totalorder %s29, 0
      %p145 = por %p143, %p144
      %s146 = ssub.s32 %s23, %s30
      %p147 = scmp.eq.s32.totalorder %s146, 0
      %s149 = sadd.s32 %s148, 1
      %s150 = scalar_select %p147, %s148, %s149
      %p153 = pneg %p147
      %p154 = scmp.eq.s32.totalorder %s23, 1
      %p155 = por %p153, %p154
      %p156 = scmp.ne.s32.totalorder %s148, %s151
      %p157 = scmp.eq.s32.totalorder %s23, 0
      %p158 = por %p156, %p157
      %p159 = scmp.ne.s32.totalorder %s148, %s151
      %p160 = scmp.eq.s32.totalorder %s28, 1
      %p161 = por %p159, %p160
      %p162 = scmp.ne.s32.totalorder %s151, %s152
      %p163 = scmp.eq.s32.totalorder %s28, 0
      %p164 = por %p162, %p163
      %p165 = scmp.ne.s32.totalorder %s151, %s152
      %p166 = scmp.eq.s32.totalorder %s29, 1
      %p167 = por %p165, %p166
      %p169 = scmp.ne.s32.totalorder %s152, %s168
      %p170 = scmp.eq.s32.totalorder %s29, 0
      %p171 = por %p169, %p170
      %s172 = ssub.s32 %s23, %s30
      %p173 = scmp.eq.s32.totalorder %s172, 0
      %s175 = sadd.s32 %s174, 1
      %s176 = scalar_select %p173, %s174, %s175
      %p179 = pneg %p173
      %p180 = scmp.eq.s32.totalorder %s23, 1
      %p181 = por %p179, %p180
      %p182 = scmp.ne.s32.totalorder %s174, %s177
      %p183 = scmp.eq.s32.totalorder %s23, 0
      %p184 = por %p182, %p183
      %p185 = scmp.ne.s32.totalorder %s174, %s177
      %p186 = scmp.eq.s32.totalorder %s28, 1
      %p187 = por %p185, %p186
      %p188 = scmp.ne.s32.totalorder %s177, %s178
      %p189 = scmp.eq.s32.totalorder %s28, 0
      %p190 = por %p188, %p189
      %p191 = scmp.ne.s32.totalorder %s177, %s178
      %p192 = scmp.eq.s32.totalorder %s29, 1
      %p193 = por %p191, %p192
      %p195 = scmp.ne.s32.totalorder %s178, %s194
      %p196 = scmp.eq.s32.totalorder %s29, 0
      %p197 = por %p195, %p196
      %p198 = scmp.le.s32.totalorder 1, %s23
      %p199 = scmp.lt.s32.totalorder %s23, 3
      %p200 = pnand %p198, %p199
      %p201 = pneg %p200
      // Predicated region
      $region9: #{tpu_custom_call.1} parent=5 // pred_check
        _
      $region10: #{tpu_custom_call.1} parent=5 // pred_check_branch
        %203 = sbr.rel (%p200) target = $region12
      $region11: #{tpu_custom_call.1} parent=5 // pred_region
        %s204 = ssub.s32 %s23, 1
        // Predicated region
        $region13: #{tpu_custom_call.1} parent=11 // pred_check
          %p205 = pneg %p70
        $region14: #{tpu_custom_call.1} parent=11 // pred_check_branch
          %207 = sbr.rel (%p205) target = $region16
        $region15: #{tpu_custom_call.1} parent=11 // pred_region
          %s209 = ssub.s32 512, 512
          %210 = vsyncadd [#allocation7], %s209
          %s211 = sshll.u32 [#allocation6], 4
          %s212 = int_to_ptr.vmem [resolvable:$true] %s211
          %217 = dma.hbm_to_vmem [thread:$0]  %s1, 512, %s212, [#allocation7], 128, 128, 8
        $region16: #{tpu_custom_call.1} parent=11 // pred_fallthru
          _
        // Predicated region
        $region17: #{tpu_custom_call.1} parent=11 // pred_check
          %p218 = pneg %p91
        $region18: #{tpu_custom_call.1} parent=11 // pred_check_branch
          %220 = sbr.rel (%p218) target = $region20
        $region19: #{tpu_custom_call.1} parent=11 // pred_region
          %s222 = ssub.s32 256, 256
          %223 = vsyncadd [#allocation7], %s222
          %s224 = sshll.u32 [#allocation8], 4
          %s225 = int_to_ptr.vmem [resolvable:$true] %s224
          %230 = dma.hbm_to_vmem [thread:$0]  %s2, 256, %s225, [#allocation7], 64, 64, 4
        $region20: #{tpu_custom_call.1} parent=11 // pred_fallthru
          _
        // Predicated region
        $region21: #{tpu_custom_call.1} parent=11 // pred_check
          %p231 = pneg %p112
        $region22: #{tpu_custom_call.1} parent=11 // pred_check_branch
          %233 = sbr.rel (%p231) target = $region24
        $region23: #{tpu_custom_call.1} parent=11 // pred_region
          _
        $region24: #{tpu_custom_call.1} parent=11 // pred_fallthru
          _
      $region12: #{tpu_custom_call.1} parent=5 // pred_fallthru
        _
      %p234 = scmp.lt.s32.totalorder %s23, 2
      // Predicated region
      $region25: #{tpu_custom_call.1} parent=5 // pred_check
        %p235 = pneg %p234
      $region26: #{tpu_custom_call.1} parent=5 // pred_check_branch
        %237 = sbr.rel (%p235) target = $region28
      $region27: #{tpu_custom_call.1} parent=5 // pred_region
        // Predicated region
        $region29: #{tpu_custom_call.1} parent=27 // pred_check
          %p238 = pneg %p43
        $region30: #{tpu_custom_call.1} parent=27 // pred_check_branch
          %240 = sbr.rel (%p238) target = $region32
        $region31: #{tpu_custom_call.1} parent=27 // pred_region
          %s241 = sand.u32 %s33, 1
          %s242 = scalar_lea.sflag [#allocation4], %s241
          %s243 = sand.u32 %s33, 1
          %s244 = smul.addr %s243, 8
          %s245 = scalar_lea.vmem [#allocation3], %s244
          %s247 = ssub.s32 128, 128
          %248 = vsyncadd %s242, %s247
          %s249 = smul.addr %s23, 128
          %s250 = scalar_lea.hbm %s0, %s249
          %s252 = sshll.u32 %s245, 4
          %s253 = int_to_ptr.vmem [resolvable:$true] %s252
          %255 = dma.hbm_to_vmem [thread:$0]  %s250, 128, %s253, %s242
        $region32: #{tpu_custom_call.1} parent=27 // pred_fallthru
          _
        // Predicated region
        $region33: #{tpu_custom_call.1} parent=27 // pred_check
          %p256 = pneg %p132
        $region34: #{tpu_custom_call.1} parent=27 // pred_check_branch
          %258 = sbr.rel (%p256) target = $region36
        $region35: #{tpu_custom_call.1} parent=27 // pred_region
          %p259 = scmp.lt.s32.totalorder %s23, 1
          %s260 = scalar_select %p259, %s23, 1
          %s261 = scalar_lea.vmem %s4, %s260
        $region36: #{tpu_custom_call.1} parent=27 // pred_fallthru
          _
      $region28: #{tpu_custom_call.1} parent=5 // pred_fallthru
        _
      %p262 = scmp.le.s32.totalorder 1, %s23
      %p263 = scmp.lt.s32.totalorder %s23, 3
      %p264 = pnand %p262, %p263
      %p265 = pneg %p264
      // Predicated region
      $region37: #{tpu_custom_call.1} parent=5 // pred_check
        _
      $region38: #{tpu_custom_call.1} parent=5 // pred_check_branch
        %267 = sbr.rel (%p264) target = $region40
      $region39: #{tpu_custom_call.1} parent=5 // pred_region
        %s268 = ssub.s32 %s23, 1
        %s269 = sand.u32 %s36, 1
        %s270 = scalar_lea.sflag [#allocation4], %s269
        %s271 = sand.u32 %s36, 1
        %s272 = smul.addr %s271, 8
        %s273 = scalar_lea.vmem [#allocation3], %s272
        // Predicated region
        $region41: #{tpu_custom_call.1} parent=39 // pred_check
          %p274 = pneg %p49
        $region42: #{tpu_custom_call.1} parent=39 // pred_check_branch
          %276 = sbr.rel (%p274) target = $region44
        $region43: #{tpu_custom_call.1} parent=39 // pred_region
          %277 = dma.done %s270, 128
        $region44: #{tpu_custom_call.1} parent=39 // pred_fallthru
          _
        // Predicated region
        $region45: #{tpu_custom_call.1} parent=39 // pred_check
          %p278 = pneg %p70
        $region46: #{tpu_custom_call.1} parent=39 // pred_check_branch
          %280 = sbr.rel (%p278) target = $region48
        $region47: #{tpu_custom_call.1} parent=39 // pred_region
          %281 = dma.done [#allocation7], 512
        $region48: #{tpu_custom_call.1} parent=39 // pred_fallthru
          _
        // Predicated region
        $region49: #{tpu_custom_call.1} parent=39 // pred_check
          %p282 = pneg %p91
        $region50: #{tpu_custom_call.1} parent=39 // pred_check_branch
          %284 = sbr.rel (%p282) target = $region52
        $region51: #{tpu_custom_call.1} parent=39 // pred_region
          %285 = dma.done [#allocation7], 256
        $region52: #{tpu_custom_call.1} parent=39 // pred_fallthru
          _
        %s286 = sand.u32 %s36, 1
        %s287 = scalar_lea.sflag [#allocation4], %s286
        %s288 = sand.u32 %s36, 1
        %s289 = smul.addr %s288, 8
        %s290 = scalar_lea.vmem [#allocation3], %s289
        %p291 = pneg %p49
        %p292 = pneg %p46
        %p293 = pneg %p70
        %p294 = pneg %p67
        %p295 = pneg %p91
        %p296 = pneg %p88
        %p297 = pneg %p112
        %p298 = pneg %p109
        %p299 = scmp.lt.s32.totalorder %s28, 1
        %s300 = scalar_select %p299, %s28, 1
        %s301 = scalar_lea.vmem %s4, %s300
        %p302 = pneg %p138
        %p303 = pneg %p135
        %p304 = pneg %p164
        %p305 = pneg %p161
        %s306 = sand.u32 %s151, 1
        %s307 = scalar_lea.sflag [#allocation5], %s306
        %s308 = sand.u32 %s151, 1
        %s309 = smul.addr %s308, 8
        %s310 = scalar_lea.vmem [#allocation9], %s309
        %p311 = pneg %p190
        %p312 = pneg %p187
        %s313 = sand.u32 %s177, 1
        %s314 = scalar_lea.sflag [#allocation11], %s313
        %s315 = sand.u32 %s177, 1
        %s316 = smul.addr %s315, 32
        %s317 = scalar_lea.vmem [#allocation10], %s316
        %p318 = scmp.lt.s32.totalorder %s28, 1
        %s319 = scalar_select %p318, %s28, 1
        %s320 = scalar_lea.vmem %s4, %s319
        %v322 = vld [vmem:[%s273] sm:$0xff]
        %v323 = vld [vmem:[#allocation6] sm:$0xff]
        %v324 = vld [vmem:[#allocation6 + $0x8] sm:$0xff]
        %v325 = vld [vmem:[#allocation6 + $0x10] sm:$0xff]
        %v326 = vld [vmem:[#allocation6 + $0x18] sm:$0xff]
        %vm327 = vcmask 261120
        %v329 = vsel %vm327, %v322, 0
        %331 = vmatprep.subr.mxu0 0.0
        %332 = vmatpush1.msra.mxu0 %v323
        %333 = vmatprep.subr.mxu0 0.0
        %334 = vmatpush1.msra.mxu0 %v324
        %335 = vmatprep.subr.mxu0 0.0
        %336 = vmatpush1.msra.mxu0 %v325
        %337 = vmatprep.subr.mxu0 0.0
        %338 = vmatpush1.msra.mxu0 %v326
        %339 = vmatprep.subr.mxu0 0.0
        %340 = vmatpush1.msra.mxu0 0.0
        %341 = vmatprep.subr.mxu0 0.0
        %342 = vmatpush1.msra.mxu0 0.0
        %343 = vmatprep.subr.mxu0 0.0
        %344 = vmatpush1.msra.mxu0 0.0
        %345 = vmatprep.subr.mxu0 0.0
        %346 = vmatpush1.msra.mxu0 0.0
        %347 = vmatprep.subr.mxu0 0.0
        %348 = vmatpush1.msra.mxu0 0.0
        %349 = vmatprep.subr.mxu0 0.0
        %350 = vmatpush1.msra.mxu0 0.0
        %351 = vmatprep.subr.mxu0 0.0
        %352 = vmatpush1.msra.mxu0 0.0
        %353 = vmatprep.subr.mxu0 0.0
        %354 = vmatpush1.msra.mxu0 0.0
        %355 = vmatprep.subr.mxu0 0.0
        %356 = vmatpush1.msra.mxu0 0.0
        %357 = vmatprep.subr.mxu0 0.0
        %358 = vmatpush1.msra.mxu0 0.0
        %359 = vmatprep.subr.mxu0 0.0
        %360 = vmatpush1.msra.mxu0 0.0
        %361 = vmatprep.subr.mxu0 0.0
        %362 = vmatpush1.msra.mxu0 0.0
        %363 = vmatprep.subr.mxu0 0.0
        %364 = vmatpush1.msra.mxu0 0.0
        %365 = vmatprep.subr.mxu0 0.0
        %366 = vmatpush1.msra.mxu0 0.0
        %367 = vmatprep.subr.mxu0 0.0
        %368 = vmatpush1.msra.mxu0 0.0
        %369 = vmatprep.subr.mxu0 0.0
        %370 = vmatpush1.msra.mxu0 0.0
        %371 = vmatprep.subr.mxu0 0.0
        %372 = vmatpush1.msra.mxu0 0.0
        %373 = vmatprep.subr.mxu0 0.0
        %374 = vmatpush1.msra.mxu0 0.0
        %375 = vmatprep.subr.mxu0 0.0
        %376 = vmatpush1.msra.mxu0 0.0
        %377 = vmatprep.subr.mxu0 0.0
        %378 = vmatpush1.msra.mxu0 0.0
        %379 = vmatprep.subr.mxu0 0.0
        %380 = vmatpush1.msra.mxu0 0.0
        %381 = vmatprep.subr.mxu0 0.0
        %382 = vmatpush1.msra.mxu0 0.0
        %383 = vmatprep.subr.mxu0 0.0
        %384 = vmatpush1.msra.mxu0 0.0
        %385 = vmatprep.subr.mxu0 0.0
        %386 = vmatpush1.msra.mxu0 0.0
        %387 = vmatprep.subr.mxu0 0.0
        %388 = vmatpush1.msra.mxu0 0.0
        %389 = vmatprep.subr.mxu0 0.0
        %390 = vmatpush1.msra.mxu0 0.0
        %391 = vmatprep.subr.mxu0 0.0
        %392 = vmatpush1.msra.mxu0 0.0
        %393 = vmatprep.subr.mxu0 0.0
        %394 = vmatpush1.msra.mxu0 0.0
        %395 = vmatprep.mubr.f32.mxu0 0.0
        %396 = vmatmul.mubr.f32.gmra.mrb[0].mxu0 %v329
        %v397 = vpop.f32.mrb[0].mxu0
        %v398 = vadd.f32 0.0, %v397
        %v399 = vpop.f32.mrb[0].mxu0
        %400 = vdwg.mxu0
        %v401 = vlaneseq
        %v402 = vshrl.u32 %v401, 7
        %v403 = vlaneseq
        %v404 = vand.u32 %v403, 127
        %v405 = vld [vmem:[%s320] sm:$0x1]
        %vm406 = vcmp.ge.s32.totalorder %v402, %v404
        %vm407 = vcmp.ne.f32.partialorder %v405, 0.0
        %v408 = vsel %vm407, 1, 0
        %v409 = vlaneseq
        %v410 = vshrl.u32 %v409, 7
        %v411 = vsub.s32 0, %v410
        %v412 = vrot.slane %v408, %v411
        %vm413 = vcmp.eq.s32.totalorder %v412, 1
        %vm414 = vmand %vm406, %vm413
        %416 = vrot.lane.b32.xlu0 %v398, 96
        %v417 = vpop.permute.xlu0 %416
        %vm418 = vcmask 64512
        %v419 = vsel %vm418, %v398, 0
        %v421 = vsel %vm418, %v417, 0
        %423 = vmatprep.subr.mxu0 0.0
        %424 = vmatpush1.xpose.msra.mxu0 %v421
        %425 = vmatprep.subr.mxu0 0.0
        %426 = vmatpush1.xpose.msra.mxu0 0.0
        %427 = vmatprep.subr.mxu0 0.0
        %428 = vmatpush1.xpose.msra.mxu0 0.0
        %429 = vmatprep.subr.mxu0 0.0
        %430 = vmatpush1.xpose.msra.mxu0 0.0
        %431 = vmatprep.subr.mxu0 0.0
        %432 = vmatpush1.xpose.msra.mxu0 0.0
        %433 = vmatprep.subr.mxu0 0.0
        %434 = vmatpush1.xpose.msra.mxu0 0.0
        %435 = vmatprep.subr.mxu0 0.0
        %436 = vmatpush1.xpose.msra.mxu0 0.0
        %437 = vmatprep.subr.mxu0 0.0
        %438 = vmatpush1.xpose.msra.mxu0 0.0
        %439 = vmatprep.subr.mxu0 0.0
        %440 = vmatpush1.xpose.msra.mxu0 0.0
        %441 = vmatprep.subr.mxu0 0.0
        %442 = vmatpush1.xpose.msra.mxu0 0.0
        %443 = vmatprep.subr.mxu0 0.0
        %444 = vmatpush1.xpose.msra.mxu0 0.0
        %445 = vmatprep.subr.mxu0 0.0
        %446 = vmatpush1.xpose.msra.mxu0 0.0
        %447 = vmatprep.subr.mxu0 0.0
        %448 = vmatpush1.xpose.msra.mxu0 0.0
        %449 = vmatprep.subr.mxu0 0.0
        %450 = vmatpush1.xpose.msra.mxu0 0.0
        %451 = vmatprep.subr.mxu0 0.0
        %452 = vmatpush1.xpose.msra.mxu0 0.0
        %453 = vmatprep.subr.mxu0 0.0
        %454 = vmatpush1.xpose.msra.mxu0 0.0
        %455 = vmatprep.subr.mxu0 0.0
        %456 = vmatpush1.xpose.msra.mxu0 0.0
        %457 = vmatprep.subr.mxu0 0.0
        %458 = vmatpush1.xpose.msra.mxu0 0.0
        %459 = vmatprep.subr.mxu0 0.0
        %460 = vmatpush1.xpose.msra.mxu0 0.0
        %461 = vmatprep.subr.mxu0 0.0
        %462 = vmatpush1.xpose.msra.mxu0 0.0
        %463 = vmatprep.subr.mxu0 0.0
        %464 = vmatpush1.xpose.msra.mxu0 0.0
        %465 = vmatprep.subr.mxu0 0.0
        %466 = vmatpush1.xpose.msra.mxu0 0.0
        %467 = vmatprep.subr.mxu0 0.0
        %468 = vmatpush1.xpose.msra.mxu0 0.0
        %469 = vmatprep.subr.mxu0 0.0
        %470 = vmatpush1.xpose.msra.mxu0 0.0
        %471 = vmatprep.subr.mxu0 0.0
        %472 = vmatpush1.xpose.msra.mxu0 0.0
        %473 = vmatprep.subr.mxu0 0.0
        %474 = vmatpush1.xpose.msra.mxu0 0.0
        %475 = vmatprep.subr.mxu0 0.0
        %476 = vmatpush1.xpose.msra.mxu0 0.0
        %477 = vmatprep.subr.mxu0 0.0
        %478 = vmatpush1.xpose.msra.mxu0 0.0
        %479 = vmatprep.subr.mxu0 0.0
        %480 = vmatpush1.xpose.msra.mxu0 0.0
        %481 = vmatprep.subr.mxu0 0.0
        %482 = vmatpush1.xpose.msra.mxu0 0.0
        %483 = vmatprep.subr.mxu0 0.0
        %484 = vmatpush1.xpose.msra.mxu0 0.0
        %485 = vmatprep.subr.mxu0 0.0
        %486 = vmatpush1.xpose.msra.mxu0 0.0
        %487 = vmatprep.mubr.f32.mxu0 0.0
        %488 = vmatmul.mubr.f32.gmra.mrb[0].mxu0 %v419
        %v489 = vpop.f32.mrb[0].mxu0
        %v490 = vadd.f32 0.0, %v489
        %v491 = vpop.f32.mrb[0].mxu0
        %492 = vdwg.mxu0
        %v493 = vmul.f32 %v490, 0.35355338
        %v494 = vsel %vm414, %v493, -1e+09
        %v495 = vsel %vm418, %v494, -inf
        %496 = vmax.xlane.f32.xlu0 %v495
        %v497 = vpop.xlane.xlu0 %496
        %v498 = vsub.f32 %v494, %v497
        %v499 = vmul.f32 %v498, 1.442695
        %v500 = vpow.pop %v499
        %v501 = vsel %vm418, %v500, 0.0
        %502 = vadd.xlane.f32.xlu0 %v501
        %v503 = vpop.xlane.xlu0 %502
        %v504 = vrcp.pop %v503
        %v505 = vmul.f32 %v503, %v504
        %v506 = vsub.f32 2.0, %v505
        %v507 = vmul.f32 %v504, %v506
        %v508 = vmul.f32 %v503, %v507
        %v509 = vsub.f32 2.0, %v508
        %v510 = vmul.f32 %v507, %v509
        %v511 = vmul.f32 %v500, %v510
        %512 = vst.msk [vmem:[%s317] sm:$0xff] %vm418, %v511
        %513 = vrot.lane.b32.xlu0 %v398, 64
        %v514 = vpop.permute.xlu0 %513
        %v517 = vsel %vm418, %v511, 0
        %519 = vmatprep.subr.mxu0 0.0
        %520 = vmatpush1.msra.mxu0 %v514
        %521 = vmatprep.subr.mxu0 0.0
        %522 = vmatpush1.msra.mxu0 0.0
        %523 = vmatprep.subr.mxu0 0.0
        %524 = vmatpush1.msra.mxu0 0.0
        %525 = vmatprep.subr.mxu0 0.0
        %526 = vmatpush1.msra.mxu0 0.0
        %527 = vmatprep.subr.mxu0 0.0
        %528 = vmatpush1.msra.mxu0 0.0
        %529 = vmatprep.subr.mxu0 0.0
        %530 = vmatpush1.msra.mxu0 0.0
        %531 = vmatprep.subr.mxu0 0.0
        %532 = vmatpush1.msra.mxu0 0.0
        %533 = vmatprep.subr.mxu0 0.0
        %534 = vmatpush1.msra.mxu0 0.0
        %535 = vmatprep.subr.mxu0 0.0
        %536 = vmatpush1.msra.mxu0 0.0
        %537 = vmatprep.subr.mxu0 0.0
        %538 = vmatpush1.msra.mxu0 0.0
        %539 = vmatprep.subr.mxu0 0.0
        %540 = vmatpush1.msra.mxu0 0.0
        %541 = vmatprep.subr.mxu0 0.0
        %542 = vmatpush1.msra.mxu0 0.0
        %543 = vmatprep.subr.mxu0 0.0
        %544 = vmatpush1.msra.mxu0 0.0
        %545 = vmatprep.subr.mxu0 0.0
        %546 = vmatpush1.msra.mxu0 0.0
        %547 = vmatprep.subr.mxu0 0.0
        %548 = vmatpush1.msra.mxu0 0.0
        %549 = vmatprep.subr.mxu0 0.0
        %550 = vmatpush1.msra.mxu0 0.0
        %551 = vmatprep.subr.mxu0 0.0
        %552 = vmatpush1.msra.mxu0 0.0
        %553 = vmatprep.subr.mxu0 0.0
        %554 = vmatpush1.msra.mxu0 0.0
        %555 = vmatprep.subr.mxu0 0.0
        %556 = vmatpush1.msra.mxu0 0.0
        %557 = vmatprep.subr.mxu0 0.0
        %558 = vmatpush1.msra.mxu0 0.0
        %559 = vmatprep.subr.mxu0 0.0
        %560 = vmatpush1.msra.mxu0 0.0
        %561 = vmatprep.subr.mxu0 0.0
        %562 = vmatpush1.msra.mxu0 0.0
        %563 = vmatprep.subr.mxu0 0.0
        %564 = vmatpush1.msra.mxu0 0.0
        %565 = vmatprep.subr.mxu0 0.0
        %566 = vmatpush1.msra.mxu0 0.0
        %567 = vmatprep.subr.mxu0 0.0
        %568 = vmatpush1.msra.mxu0 0.0
        %569 = vmatprep.subr.mxu0 0.0
        %570 = vmatpush1.msra.mxu0 0.0
        %571 = vmatprep.subr.mxu0 0.0
        %572 = vmatpush1.msra.mxu0 0.0
        %573 = vmatprep.subr.mxu0 0.0
        %574 = vmatpush1.msra.mxu0 0.0
        %575 = vmatprep.subr.mxu0 0.0
        %576 = vmatpush1.msra.mxu0 0.0
        %577 = vmatprep.subr.mxu0 0.0
        %578 = vmatpush1.msra.mxu0 0.0
        %579 = vmatprep.subr.mxu0 0.0
        %580 = vmatpush1.msra.mxu0 0.0
        %581 = vmatprep.subr.mxu0 0.0
        %582 = vmatpush1.msra.mxu0 0.0
        %583 = vmatprep.mubr.f32.mxu0 0.0
        %584 = vmatmul.mubr.f32.gmra.mrb[0].mxu0 %v517
        %v585 = vpop.f32.mrb[0].mxu0
        %v586 = vadd.f32 0.0, %v585
        %v587 = vpop.f32.mrb[0].mxu0
        %588 = vdwg.mxu0
        %589 = vst.msk [vmem:[#allocation2] sm:$0xff] %vm418, %v586
        %590 = vrot.lane.b32.xlu0 %v398, 120
        %v591 = vpop.permute.xlu0 %590
        %592 = vrot.lane.b32.xlu0 %v398, 88
        %v593 = vpop.permute.xlu0 %592
        %v594 = vsel %vm418, %v591, 0
        %v596 = vsel %vm418, %v593, 0
        %598 = vmatprep.subr.mxu0 0.0
        %599 = vmatpush1.xpose.msra.mxu0 %v596
        %600 = vmatprep.subr.mxu0 0.0
        %601 = vmatpush1.xpose.msra.mxu0 0.0
        %602 = vmatprep.subr.mxu0 0.0
        %603 = vmatpush1.xpose.msra.mxu0 0.0
        %604 = vmatprep.subr.mxu0 0.0
        %605 = vmatpush1.xpose.msra.mxu0 0.0
        %606 = vmatprep.subr.mxu0 0.0
        %607 = vmatpush1.xpose.msra.mxu0 0.0
        %608 = vmatprep.subr.mxu0 0.0
        %609 = vmatpush1.xpose.msra.mxu0 0.0
        %610 = vmatprep.subr.mxu0 0.0
        %611 = vmatpush1.xpose.msra.mxu0 0.0
        %612 = vmatprep.subr.mxu0 0.0
        %613 = vmatpush1.xpose.msra.mxu0 0.0
        %614 = vmatprep.subr.mxu0 0.0
        %615 = vmatpush1.xpose.msra.mxu0 0.0
        %616 = vmatprep.subr.mxu0 0.0
        %617 = vmatpush1.xpose.msra.mxu0 0.0
        %618 = vmatprep.subr.mxu0 0.0
        %619 = vmatpush1.xpose.msra.mxu0 0.0
        %620 = vmatprep.subr.mxu0 0.0
        %621 = vmatpush1.xpose.msra.mxu0 0.0
        %622 = vmatprep.subr.mxu0 0.0
        %623 = vmatpush1.xpose.msra.mxu0 0.0
        %624 = vmatprep.subr.mxu0 0.0
        %625 = vmatpush1.xpose.msra.mxu0 0.0
        %626 = vmatprep.subr.mxu0 0.0
        %627 = vmatpush1.xpose.msra.mxu0 0.0
        %628 = vmatprep.subr.mxu0 0.0
        %629 = vmatpush1.xpose.msra.mxu0 0.0
        %630 = vmatprep.subr.mxu0 0.0
        %631 = vmatpush1.xpose.msra.mxu0 0.0
        %632 = vmatprep.subr.mxu0 0.0
        %633 = vmatpush1.xpose.msra.mxu0 0.0
        %634 = vmatprep.subr.mxu0 0.0
        %635 = vmatpush1.xpose.msra.mxu0 0.0
        %636 = vmatprep.subr.mxu0 0.0
        %637 = vmatpush1.xpose.msra.mxu0 0.0
        %638 = vmatprep.subr.mxu0 0.0
        %639 = vmatpush1.xpose.msra.mxu0 0.0
        %640 = vmatprep.subr.mxu0 0.0
        %641 = vmatpush1.xpose.msra.mxu0 0.0
        %642 = vmatprep.subr.mxu0 0.0
        %643 = vmatpush1.xpose.msra.mxu0 0.0
        %644 = vmatprep.subr.mxu0 0.0
        %645 = vmatpush1.xpose.msra.mxu0 0.0
        %646 = vmatprep.subr.mxu0 0.0
        %647 = vmatpush1.xpose.msra.mxu0 0.0
        %648 = vmatprep.subr.mxu0 0.0
        %649 = vmatpush1.xpose.msra.mxu0 0.0
        %650 = vmatprep.subr.mxu0 0.0
        %651 = vmatpush1.xpose.msra.mxu0 0.0
        %652 = vmatprep.subr.mxu0 0.0
        %653 = vmatpush1.xpose.msra.mxu0 0.0
        %654 = vmatprep.subr.mxu0 0.0
        %655 = vmatpush1.xpose.msra.mxu0 0.0
        %656 = vmatprep.subr.mxu0 0.0
        %657 = vmatpush1.xpose.msra.mxu0 0.0
        %658 = vmatprep.subr.mxu0 0.0
        %659 = vmatpush1.xpose.msra.mxu0 0.0
        %660 = vmatprep.subr.mxu0 0.0
        %661 = vmatpush1.xpose.msra.mxu0 0.0
        %662 = vmatprep.mubr.f32.mxu0 0.0
        %663 = vmatmul.mubr.f32.gmra.mrb[0].mxu0 %v594
        %v664 = vpop.f32.mrb[0].mxu0
        %v665 = vadd.f32 0.0, %v664
        %v666 = vpop.f32.mrb[0].mxu0
        %667 = vdwg.mxu0
        %v668 = vmul.f32 %v665, 0.35355338
        %v669 = vsel %vm414, %v668, -1e+09
        %v670 = vsel %vm418, %v669, -inf
        %671 = vmax.xlane.f32.xlu0 %v670
        %v672 = vpop.xlane.xlu0 %671
        %v673 = vsub.f32 %v669, %v672
        %v674 = vmul.f32 %v673, 1.442695
        %v675 = vpow.pop %v674
        %v676 = vsel %vm418, %v675, 0.0
        %677 = vadd.xlane.f32.xlu0 %v676
        %v678 = vpop.xlane.xlu0 %677
        %v679 = vrcp.pop %v678
        %v680 = vmul.f32 %v678, %v679
        %v681 = vsub.f32 2.0, %v680
        %v682 = vmul.f32 %v679, %v681
        %v683 = vmul.f32 %v678, %v682
        %v684 = vsub.f32 2.0, %v683
        %v685 = vmul.f32 %v682, %v684
        %v686 = vmul.f32 %v675, %v685
        %s687 = scalar_lea.vmem %s317, 8 [#allocation10]
        %688 = vst.msk [vmem:[%s687] sm:$0xff] %vm418, %v686
        %689 = vrot.lane.b32.xlu0 %v398, 56
        %v690 = vpop.permute.xlu0 %689
        %v693 = vsel %vm418, %v686, 0
        %695 = vmatprep.subr.mxu0 0.0
        %696 = vmatpush1.msra.mxu0 %v690
        %697 = vmatprep.subr.mxu0 0.0
        %698 = vmatpush1.msra.mxu0 0.0
        %699 = vmatprep.subr.mxu0 0.0
        %700 = vmatpush1.msra.mxu0 0.0
        %701 = vmatprep.subr.mxu0 0.0
        %702 = vmatpush1.msra.mxu0 0.0
        %703 = vmatprep.subr.mxu0 0.0
        %704 = vmatpush1.msra.mxu0 0.0
        %705 = vmatprep.subr.mxu0 0.0
        %706 = vmatpush1.msra.mxu0 0.0
        %707 = vmatprep.subr.mxu0 0.0
        %708 = vmatpush1.msra.mxu0 0.0
        %709 = vmatprep.subr.mxu0 0.0
        %710 = vmatpush1.msra.mxu0 0.0
        %711 = vmatprep.subr.mxu0 0.0
        %712 = vmatpush1.msra.mxu0 0.0
        %713 = vmatprep.subr.mxu0 0.0
        %714 = vmatpush1.msra.mxu0 0.0
        %715 = vmatprep.subr.mxu0 0.0
        %716 = vmatpush1.msra.mxu0 0.0
        %717 = vmatprep.subr.mxu0 0.0
        %718 = vmatpush1.msra.mxu0 0.0
        %719 = vmatprep.subr.mxu0 0.0
        %720 = vmatpush1.msra.mxu0 0.0
        %721 = vmatprep.subr.mxu0 0.0
        %722 = vmatpush1.msra.mxu0 0.0
        %723 = vmatprep.subr.mxu0 0.0
        %724 = vmatpush1.msra.mxu0 0.0
        %725 = vmatprep.subr.mxu0 0.0
        %726 = vmatpush1.msra.mxu0 0.0
        %727 = vmatprep.subr.mxu0 0.0
        %728 = vmatpush1.msra.mxu0 0.0
        %729 = vmatprep.subr.mxu0 0.0
        %730 = vmatpush1.msra.mxu0 0.0
        %731 = vmatprep.subr.mxu0 0.0
        %732 = vmatpush1.msra.mxu0 0.0
        %733 = vmatprep.subr.mxu0 0.0
        %734 = vmatpush1.msra.mxu0 0.0
        %735 = vmatprep.subr.mxu0 0.0
        %736 = vmatpush1.msra.mxu0 0.0
        %737 = vmatprep.subr.mxu0 0.0
        %738 = vmatpush1.msra.mxu0 0.0
        %739 = vmatprep.subr.mxu0 0.0
        %740 = vmatpush1.msra.mxu0 0.0
        %741 = vmatprep.subr.mxu0 0.0
        %742 = vmatpush1.msra.mxu0 0.0
        %743 = vmatprep.subr.mxu0 0.0
        %744 = vmatpush1.msra.mxu0 0.0
        %745 = vmatprep.subr.mxu0 0.0
        %746 = vmatpush1.msra.mxu0 0.0
        %747 = vmatprep.subr.mxu0 0.0
        %748 = vmatpush1.msra.mxu0 0.0
        %749 = vmatprep.subr.mxu0 0.0
        %750 = vmatpush1.msra.mxu0 0.0
        %751 = vmatprep.subr.mxu0 0.0
        %752 = vmatpush1.msra.mxu0 0.0
        %753 = vmatprep.subr.mxu0 0.0
        %754 = vmatpush1.msra.mxu0 0.0
        %755 = vmatprep.subr.mxu0 0.0
        %756 = vmatpush1.msra.mxu0 0.0
        %757 = vmatprep.subr.mxu0 0.0
        %758 = vmatpush1.msra.mxu0 0.0
        %759 = vmatprep.mubr.f32.mxu0 0.0
        %760 = vmatmul.mubr.f32.gmra.mrb[0].mxu0 %v693
        %v761 = vpop.f32.mrb[0].mxu0
        %v762 = vadd.f32 0.0, %v761
        %v763 = vpop.f32.mrb[0].mxu0
        %764 = vdwg.mxu0
        %766 = vrot.lane.b32.xlu0 %v762, 8
        %v767 = vpop.permute.xlu0 %766
        %vm769 = vcmask 130112
        %770 = vst.msk [vmem:[#allocation2] sm:$0xff] %vm769, %v767
        %771 = vrot.lane.b32.xlu0 %v398, 112
        %v772 = vpop.permute.xlu0 %771
        %773 = vrot.lane.b32.xlu0 %v398, 80
        %v774 = vpop.permute.xlu0 %773
        %v775 = vsel %vm418, %v772, 0
        %v777 = vsel %vm418, %v774, 0
        %779 = vmatprep.subr.mxu0 0.0
        %780 = vmatpush1.xpose.msra.mxu0 %v777
        %781 = vmatprep.subr.mxu0 0.0
        %782 = vmatpush1.xpose.msra.mxu0 0.0
        %783 = vmatprep.subr.mxu0 0.0
        %784 = vmatpush1.xpose.msra.mxu0 0.0
        %785 = vmatprep.subr.mxu0 0.0
        %786 = vmatpush1.xpose.msra.mxu0 0.0
        %787 = vmatprep.subr.mxu0 0.0
        %788 = vmatpush1.xpose.msra.mxu0 0.0
        %789 = vmatprep.subr.mxu0 0.0
        %790 = vmatpush1.xpose.msra.mxu0 0.0
        %791 = vmatprep.subr.mxu0 0.0
        %792 = vmatpush1.xpose.msra.mxu0 0.0
        %793 = vmatprep.subr.mxu0 0.0
        %794 = vmatpush1.xpose.msra.mxu0 0.0
        %795 = vmatprep.subr.mxu0 0.0
        %796 = vmatpush1.xpose.msra.mxu0 0.0
        %797 = vmatprep.subr.mxu0 0.0
        %798 = vmatpush1.xpose.msra.mxu0 0.0
        %799 = vmatprep.subr.mxu0 0.0
        %800 = vmatpush1.xpose.msra.mxu0 0.0
        %801 = vmatprep.subr.mxu0 0.0
        %802 = vmatpush1.xpose.msra.mxu0 0.0
        %803 = vmatprep.subr.mxu0 0.0
        %804 = vmatpush1.xpose.msra.mxu0 0.0
        %805 = vmatprep.subr.mxu0 0.0
        %806 = vmatpush1.xpose.msra.mxu0 0.0
        %807 = vmatprep.subr.mxu0 0.0
        %808 = vmatpush1.xpose.msra.mxu0 0.0
        %809 = vmatprep.subr.mxu0 0.0
        %810 = vmatpush1.xpose.msra.mxu0 0.0
        %811 = vmatprep.subr.mxu0 0.0
        %812 = vmatpush1.xpose.msra.mxu0 0.0
        %813 = vmatprep.subr.mxu0 0.0
        %814 = vmatpush1.xpose.msra.mxu0 0.0
        %815 = vmatprep.subr.mxu0 0.0
        %816 = vmatpush1.xpose.msra.mxu0 0.0
        %817 = vmatprep.subr.mxu0 0.0
        %818 = vmatpush1.xpose.msra.mxu0 0.0
        %819 = vmatprep.subr.mxu0 0.0
        %820 = vmatpush1.xpose.msra.mxu0 0.0
        %821 = vmatprep.subr.mxu0 0.0
        %822 = vmatpush1.xpose.msra.mxu0 0.0
        %823 = vmatprep.subr.mxu0 0.0
        %824 = vmatpush1.xpose.msra.mxu0 0.0
        %825 = vmatprep.subr.mxu0 0.0
        %826 = vmatpush1.xpose.msra.mxu0 0.0
        %827 = vmatprep.subr.mxu0 0.0
        %828 = vmatpush1.xpose.msra.mxu0 0.0
        %829 = vmatprep.subr.mxu0 0.0
        %830 = vmatpush1.xpose.msra.mxu0 0.0
        %831 = vmatprep.subr.mxu0 0.0
        %832 = vmatpush1.xpose.msra.mxu0 0.0
        %833 = vmatprep.subr.mxu0 0.0
        %834 = vmatpush1.xpose.msra.mxu0 0.0
        %835 = vmatprep.subr.mxu0 0.0
        %836 = vmatpush1.xpose.msra.mxu0 0.0
        %837 = vmatprep.subr.mxu0 0.0
        %838 = vmatpush1.xpose.msra.mxu0 0.0
        %839 = vmatprep.subr.mxu0 0.0
        %840 = vmatpush1.xpose.msra.mxu0 0.0
        %841 = vmatprep.subr.mxu0 0.0
        %842 = vmatpush1.xpose.msra.mxu0 0.0
        %843 = vmatprep.mubr.f32.mxu0 0.0
        %844 = vmatmul.mubr.f32.gmra.mrb[0].mxu0 %v775
        %v845 = vpop.f32.mrb[0].mxu0
        %v846 = vadd.f32 0.0, %v845
        %v847 = vpop.f32.mrb[0].mxu0
        %848 = vdwg.mxu0
        %v849 = vmul.f32 %v846, 0.35355338
        %v850 = vsel %vm414, %v849, -1e+09
        %v851 = vsel %vm418, %v850, -inf
        %852 = vmax.xlane.f32.xlu0 %v851
        %v853 = vpop.xlane.xlu0 %852
        %v854 = vsub.f32 %v850, %v853
        %v855 = vmul.f32 %v854, 1.442695
        %v856 = vpow.pop %v855
        %v857 = vsel %vm418, %v856, 0.0
        %858 = vadd.xlane.f32.xlu0 %v857
        %v859 = vpop.xlane.xlu0 %858
        %v860 = vrcp.pop %v859
        %v861 = vmul.f32 %v859, %v860
        %v862 = vsub.f32 2.0, %v861
        %v863 = vmul.f32 %v860, %v862
        %v864 = vmul.f32 %v859, %v863
        %v865 = vsub.f32 2.0, %v864
        %v866 = vmul.f32 %v863, %v865
        %v867 = vmul.f32 %v856, %v866
        %s868 = scalar_lea.vmem %s317, 16 [#allocation10]
        %869 = vst.msk [vmem:[%s868] sm:$0xff] %vm418, %v867
        %870 = vrot.lane.b32.xlu0 %v398, 48
        %v871 = vpop.permute.xlu0 %870
        %v874 = vsel %vm418, %v867, 0
        %876 = vmatprep.subr.mxu0 0.0
        %877 = vmatpush1.msra.mxu0 %v871
        %878 = vmatprep.subr.mxu0 0.0
        %879 = vmatpush1.msra.mxu0 0.0
        %880 = vmatprep.subr.mxu0 0.0
        %881 = vmatpush1.msra.mxu0 0.0
        %882 = vmatprep.subr.mxu0 0.0
        %883 = vmatpush1.msra.mxu0 0.0
        %884 = vmatprep.subr.mxu0 0.0
        %885 = vmatpush1.msra.mxu0 0.0
        %886 = vmatprep.subr.mxu0 0.0
        %887 = vmatpush1.msra.mxu0 0.0
        %888 = vmatprep.subr.mxu0 0.0
        %889 = vmatpush1.msra.mxu0 0.0
        %890 = vmatprep.subr.mxu0 0.0
        %891 = vmatpush1.msra.mxu0 0.0
        %892 = vmatprep.subr.mxu0 0.0
        %893 = vmatpush1.msra.mxu0 0.0
        %894 = vmatprep.subr.mxu0 0.0
        %895 = vmatpush1.msra.mxu0 0.0
        %896 = vmatprep.subr.mxu0 0.0
        %897 = vmatpush1.msra.mxu0 0.0
        %898 = vmatprep.subr.mxu0 0.0
        %899 = vmatpush1.msra.mxu0 0.0
        %900 = vmatprep.subr.mxu0 0.0
        %901 = vmatpush1.msra.mxu0 0.0
        %902 = vmatprep.subr.mxu0 0.0
        %903 = vmatpush1.msra.mxu0 0.0
        %904 = vmatprep.subr.mxu0 0.0
        %905 = vmatpush1.msra.mxu0 0.0
        %906 = vmatprep.subr.mxu0 0.0
        %907 = vmatpush1.msra.mxu0 0.0
        %908 = vmatprep.subr.mxu0 0.0
        %909 = vmatpush1.msra.mxu0 0.0
        %910 = vmatprep.subr.mxu0 0.0
        %911 = vmatpush1.msra.mxu0 0.0
        %912 = vmatprep.subr.mxu0 0.0
        %913 = vmatpush1.msra.mxu0 0.0
        %914 = vmatprep.subr.mxu0 0.0
        %915 = vmatpush1.msra.mxu0 0.0
        %916 = vmatprep.subr.mxu0 0.0
        %917 = vmatpush1.msra.mxu0 0.0
        %918 = vmatprep.subr.mxu0 0.0
        %919 = vmatpush1.msra.mxu0 0.0
        %920 = vmatprep.subr.mxu0 0.0
        %921 = vmatpush1.msra.mxu0 0.0
        %922 = vmatprep.subr.mxu0 0.0
        %923 = vmatpush1.msra.mxu0 0.0
        %924 = vmatprep.subr.mxu0 0.0
        %925 = vmatpush1.msra.mxu0 0.0
        %926 = vmatprep.subr.mxu0 0.0
        %927 = vmatpush1.msra.mxu0 0.0
        %928 = vmatprep.subr.mxu0 0.0
        %929 = vmatpush1.msra.mxu0 0.0
        %930 = vmatprep.subr.mxu0 0.0
        %931 = vmatpush1.msra.mxu0 0.0
        %932 = vmatprep.subr.mxu0 0.0
        %933 = vmatpush1.msra.mxu0 0.0
        %934 = vmatprep.subr.mxu0 0.0
        %935 = vmatpush1.msra.mxu0 0.0
        %936 = vmatprep.subr.mxu0 0.0
        %937 = vmatpush1.msra.mxu0 0.0
        %938 = vmatprep.subr.mxu0 0.0
        %939 = vmatpush1.msra.mxu0 0.0
        %940 = vmatprep.mubr.f32.mxu0 0.0
        %941 = vmatmul.mubr.f32.gmra.mrb[0].mxu0 %v874
        %v942 = vpop.f32.mrb[0].mxu0
        %v943 = vadd.f32 0.0, %v942
        %v944 = vpop.f32.mrb[0].mxu0
        %945 = vdwg.mxu0
        %947 = vrot.lane.b32.xlu0 %v943, 16
        %v948 = vpop.permute.xlu0 %947
        %vm950 = vcmask 195712
        %951 = vst.msk [vmem:[#allocation2] sm:$0xff] %vm950, %v948
        %952 = vrot.lane.b32.xlu0 %v398, 104
        %v953 = vpop.permute.xlu0 %952
        %954 = vrot.lane.b32.xlu0 %v398, 72
        %v955 = vpop.permute.xlu0 %954
        %v956 = vsel %vm418, %v953, 0
        %v958 = vsel %vm418, %v955, 0
        %960 = vmatprep.subr.mxu0 0.0
        %961 = vmatpush1.xpose.msra.mxu0 %v958
        %962 = vmatprep.subr.mxu0 0.0
        %963 = vmatpush1.xpose.msra.mxu0 0.0
        %964 = vmatprep.subr.mxu0 0.0
        %965 = vmatpush1.xpose.msra.mxu0 0.0
        %966 = vmatprep.subr.mxu0 0.0
        %967 = vmatpush1.xpose.msra.mxu0 0.0
        %968 = vmatprep.subr.mxu0 0.0
        %969 = vmatpush1.xpose.msra.mxu0 0.0
        %970 = vmatprep.subr.mxu0 0.0
        %971 = vmatpush1.xpose.msra.mxu0 0.0
        %972 = vmatprep.subr.mxu0 0.0
        %973 = vmatpush1.xpose.msra.mxu0 0.0
        %974 = vmatprep.subr.mxu0 0.0
        %975 = vmatpush1.xpose.msra.mxu0 0.0
        %976 = vmatprep.subr.mxu0 0.0
        %977 = vmatpush1.xpose.msra.mxu0 0.0
        %978 = vmatprep.subr.mxu0 0.0
        %979 = vmatpush1.xpose.msra.mxu0 0.0
        %980 = vmatprep.subr.mxu0 0.0
        %981 = vmatpush1.xpose.msra.mxu0 0.0
        %982 = vmatprep.subr.mxu0 0.0
        %983 = vmatpush1.xpose.msra.mxu0 0.0
        %984 = vmatprep.subr.mxu0 0.0
        %985 = vmatpush1.xpose.msra.mxu0 0.0
        %986 = vmatprep.subr.mxu0 0.0
        %987 = vmatpush1.xpose.msra.mxu0 0.0
        %988 = vmatprep.subr.mxu0 0.0
        %989 = vmatpush1.xpose.msra.mxu0 0.0
        %990 = vmatprep.subr.mxu0 0.0
        %991 = vmatpush1.xpose.msra.mxu0 0.0
        %992 = vmatprep.subr.mxu0 0.0
        %993 = vmatpush1.xpose.msra.mxu0 0.0
        %994 = vmatprep.subr.mxu0 0.0
        %995 = vmatpush1.xpose.msra.mxu0 0.0
        %996 = vmatprep.subr.mxu0 0.0
        %997 = vmatpush1.xpose.msra.mxu0 0.0
        %998 = vmatprep.subr.mxu0 0.0
        %999 = vmatpush1.xpose.msra.mxu0 0.0
        %1000 = vmatprep.subr.mxu0 0.0
        %1001 = vmatpush1.xpose.msra.mxu0 0.0
        %1002 = vmatprep.subr.mxu0 0.0
        %1003 = vmatpush1.xpose.msra.mxu0 0.0
        %1004 = vmatprep.subr.mxu0 0.0
        %1005 = vmatpush1.xpose.msra.mxu0 0.0
        %1006 = vmatprep.subr.mxu0 0.0
        %1007 = vmatpush1.xpose.msra.mxu0 0.0
        %1008 = vmatprep.subr.mxu0 0.0
        %1009 = vmatpush1.xpose.msra.mxu0 0.0
        %1010 = vmatprep.subr.mxu0 0.0
        %1011 = vmatpush1.xpose.msra.mxu0 0.0
        %1012 = vmatprep.subr.mxu0 0.0
        %1013 = vmatpush1.xpose.msra.mxu0 0.0
        %1014 = vmatprep.subr.mxu0 0.0
        %1015 = vmatpush1.xpose.msra.mxu0 0.0
        %1016 = vmatprep.subr.mxu0 0.0
        %1017 = vmatpush1.xpose.msra.mxu0 0.0
        %1018 = vmatprep.subr.mxu0 0.0
        %1019 = vmatpush1.xpose.msra.mxu0 0.0
        %1020 = vmatprep.subr.mxu0 0.0
        %1021 = vmatpush1.xpose.msra.mxu0 0.0
        %1022 = vmatprep.subr.mxu0 0.0
        %1023 = vmatpush1.xpose.msra.mxu0 0.0
        %1024 = vmatprep.mubr.f32.mxu0 0.0
        %1025 = vmatmul.mubr.f32.gmra.mrb[0].mxu0 %v956
        %v1026 = vpop.f32.mrb[0].mxu0
        %v1027 = vadd.f32 0.0, %v1026
        %v1028 = vpop.f32.mrb[0].mxu0
        %1029 = vdwg.mxu0
        %v1030 = vmul.f32 %v1027, 0.35355338
        %v1031 = vsel %vm414, %v1030, -1e+09
        %v1032 = vsel %vm418, %v1031, -inf
        %1033 = vmax.xlane.f32.xlu0 %v1032
        %v1034 = vpop.xlane.xlu0 %1033
        %v1035 = vsub.f32 %v1031, %v1034
        %v1036 = vmul.f32 %v1035, 1.442695
        %v1037 = vpow.pop %v1036
        %v1038 = vsel %vm418, %v1037, 0.0
        %1039 = vadd.xlane.f32.xlu0 %v1038
        %v1040 = vpop.xlane.xlu0 %1039
        %v1041 = vrcp.pop %v1040
        %v1042 = vmul.f32 %v1040, %v1041
        %v1043 = vsub.f32 2.0, %v1042
        %v1044 = vmul.f32 %v1041, %v1043
        %v1045 = vmul.f32 %v1040, %v1044
        %v1046 = vsub.f32 2.0, %v1045
        %v1047 = vmul.f32 %v1044, %v1046
        %v1048 = vmul.f32 %v1037, %v1047
        %s1049 = scalar_lea.vmem %s317, 24 [#allocation10]
        %1050 = vst.msk [vmem:[%s1049] sm:$0xff] %vm418, %v1048
        %1051 = vrot.lane.b32.xlu0 %v398, 40
        %v1052 = vpop.permute.xlu0 %1051
        %v1055 = vsel %vm418, %v1048, 0
        %1057 = vmatprep.subr.mxu0 0.0
        %1058 = vmatpush1.msra.mxu0 %v1052
        %1059 = vmatprep.subr.mxu0 0.0
        %1060 = vmatpush1.msra.mxu0 0.0
        %1061 = vmatprep.subr.mxu0 0.0
        %1062 = vmatpush1.msra.mxu0 0.0
        %1063 = vmatprep.subr.mxu0 0.0
        %1064 = vmatpush1.msra.mxu0 0.0
        %1065 = vmatprep.subr.mxu0 0.0
        %1066 = vmatpush1.msra.mxu0 0.0
        %1067 = vmatprep.subr.mxu0 0.0
        %1068 = vmatpush1.msra.mxu0 0.0
        %1069 = vmatprep.subr.mxu0 0.0
        %1070 = vmatpush1.msra.mxu0 0.0
        %1071 = vmatprep.subr.mxu0 0.0
        %1072 = vmatpush1.msra.mxu0 0.0
        %1073 = vmatprep.subr.mxu0 0.0
        %1074 = vmatpush1.msra.mxu0 0.0
        %1075 = vmatprep.subr.mxu0 0.0
        %1076 = vmatpush1.msra.mxu0 0.0
        %1077 = vmatprep.subr.mxu0 0.0
        %1078 = vmatpush1.msra.mxu0 0.0
        %1079 = vmatprep.subr.mxu0 0.0
        %1080 = vmatpush1.msra.mxu0 0.0
        %1081 = vmatprep.subr.mxu0 0.0
        %1082 = vmatpush1.msra.mxu0 0.0
        %1083 = vmatprep.subr.mxu0 0.0
        %1084 = vmatpush1.msra.mxu0 0.0
        %1085 = vmatprep.subr.mxu0 0.0
        %1086 = vmatpush1.msra.mxu0 0.0
        %1087 = vmatprep.subr.mxu0 0.0
        %1088 = vmatpush1.msra.mxu0 0.0
        %1089 = vmatprep.subr.mxu0 0.0
        %1090 = vmatpush1.msra.mxu0 0.0
        %1091 = vmatprep.subr.mxu0 0.0
        %1092 = vmatpush1.msra.mxu0 0.0
        %1093 = vmatprep.subr.mxu0 0.0
        %1094 = vmatpush1.msra.mxu0 0.0
        %1095 = vmatprep.subr.mxu0 0.0
        %1096 = vmatpush1.msra.mxu0 0.0
        %1097 = vmatprep.subr.mxu0 0.0
        %1098 = vmatpush1.msra.mxu0 0.0
        %1099 = vmatprep.subr.mxu0 0.0
        %1100 = vmatpush1.msra.mxu0 0.0
        %1101 = vmatprep.subr.mxu0 0.0
        %1102 = vmatpush1.msra.mxu0 0.0
        %1103 = vmatprep.subr.mxu0 0.0
        %1104 = vmatpush1.msra.mxu0 0.0
        %1105 = vmatprep.subr.mxu0 0.0
        %1106 = vmatpush1.msra.mxu0 0.0
        %1107 = vmatprep.subr.mxu0 0.0
        %1108 = vmatpush1.msra.mxu0 0.0
        %1109 = vmatprep.subr.mxu0 0.0
        %1110 = vmatpush1.msra.mxu0 0.0
        %1111 = vmatprep.subr.mxu0 0.0
        %1112 = vmatpush1.msra.mxu0 0.0
        %1113 = vmatprep.subr.mxu0 0.0
        %1114 = vmatpush1.msra.mxu0 0.0
        %1115 = vmatprep.subr.mxu0 0.0
        %1116 = vmatpush1.msra.mxu0 0.0
        %1117 = vmatprep.subr.mxu0 0.0
        %1118 = vmatpush1.msra.mxu0 0.0
        %1119 = vmatprep.subr.mxu0 0.0
        %1120 = vmatpush1.msra.mxu0 0.0
        %1121 = vmatprep.mubr.f32.mxu0 0.0
        %1122 = vmatmul.mubr.f32.gmra.mrb[0].mxu0 %v1055
        %v1123 = vpop.f32.mrb[0].mxu0
        %v1124 = vadd.f32 0.0, %v1123
        %v1125 = vpop.f32.mrb[0].mxu0
        %1126 = vdwg.mxu0
        %1128 = vrot.lane.b32.xlu0 %v1124, 24
        %v1129 = vpop.permute.xlu0 %1128
        %vm1131 = vcmask 261312
        %1132 = vst.msk [vmem:[#allocation2] sm:$0xff] %vm1131, %v1129
        %v1133 = vld [vmem:[#allocation2] sm:$0xff]
        %v1134 = vpack.c.bf16 %v1133, %v1133
        %v1135 = vld [vmem:[#allocation8] sm:$0xf]
        %v1136 = vld [vmem:[#allocation8 + $0x4] sm:$0xf]
        %v1137 = vld [vmem:[#allocation8 + $0x8] sm:$0xf]
        %v1138 = vld [vmem:[#allocation8 + $0xc] sm:$0xf]
        %v1139 = vld [vmem:[%s3] sm:$0x1]
        %v1141 = vlaneseq
        %v1142 = vshrl.u32 %v1141, 7
        %v1143 = vsub.s32 0, %v1142
        %v1144 = vrot.slane %v1139, %v1143
        %v1150 = vunpack.c.l.b16 %v1135
        %v1151 = vunpack.c.l.b16 %v1136
        %v1152 = vunpack.c.l.b16 %v1137
        %v1153 = vunpack.c.l.b16 %v1138
        %v1154 = vpack.c.b16 %v1151, %v1150
        %v1155 = vpack.c.b16 %v1153, %v1152
        %v1159 = vsel %vm327, %v1134, 0
        %1161 = vmatprep.subr.bf16.mxu0 0
        %1162 = vmatpush1.bf16.msra.mxu0 %v1154
        %1163 = vmatprep.subr.bf16.mxu0 0
        %1164 = vmatpush1.bf16.msra.mxu0 %v1155
        %1165 = vmatprep.subr.bf16.mxu0 0
        %1166 = vmatpush1.bf16.msra.mxu0 0
        %1167 = vmatprep.subr.bf16.mxu0 0
        %1168 = vmatpush1.bf16.msra.mxu0 0
        %1169 = vmatprep.subr.bf16.mxu0 0
        %1170 = vmatpush1.bf16.msra.mxu0 0
        %1171 = vmatprep.subr.bf16.mxu0 0
        %1172 = vmatpush1.bf16.msra.mxu0 0
        %1173 = vmatprep.subr.bf16.mxu0 0
        %1174 = vmatpush1.bf16.msra.mxu0 0
        %1175 = vmatprep.subr.bf16.mxu0 0
        %1176 = vmatpush1.bf16.msra.mxu0 0
        %1177 = vmatprep.subr.bf16.mxu0 0
        %1178 = vmatpush1.bf16.msra.mxu0 0
        %1179 = vmatprep.subr.bf16.mxu0 0
        %1180 = vmatpush1.bf16.msra.mxu0 0
        %1181 = vmatprep.subr.bf16.mxu0 0
        %1182 = vmatpush1.bf16.msra.mxu0 0
        %1183 = vmatprep.subr.bf16.mxu0 0
        %1184 = vmatpush1.bf16.msra.mxu0 0
        %1185 = vmatprep.subr.bf16.mxu0 0
        %1186 = vmatpush1.bf16.msra.mxu0 0
        %1187 = vmatprep.subr.bf16.mxu0 0
        %1188 = vmatpush1.bf16.msra.mxu0 0
        %1189 = vmatprep.subr.bf16.mxu0 0
        %1190 = vmatpush1.bf16.msra.mxu0 0
        %1191 = vmatprep.subr.bf16.mxu0 0
        %1192 = vmatpush1.bf16.msra.mxu0 0
        %1193 = vmatprep.mubr.bf16.mxu0 0
        %1194 = vmatmul.mubr.bf16.gmra.mrb[0].mxu0 %v1159
        %v1195 = vpop.f32.mrb[0].mxu0
        %v1196 = vadd.f32 %v1144, %v1195
        %v1197 = vpop.f32.mrb[0].mxu0
        %v1198 = vpop.f32.mrb[0].mxu0
        %v1199 = vpop.f32.mrb[0].mxu0
        %1200 = vdwg.mxu0
        %1201 = vst.msk [vmem:[%s310] sm:$0xff] %vm327, %v1196
        %s1202 = sand.u32 %s151, 1
        %s1203 = scalar_lea.sflag [#allocation5], %s1202
        %s1204 = sand.u32 %s151, 1
        %s1205 = smul.addr %s1204, 8
        %s1206 = scalar_lea.vmem [#allocation9], %s1205
        %s1207 = sand.u32 %s177, 1
        %s1208 = scalar_lea.sflag [#allocation11], %s1207
        %s1209 = sand.u32 %s177, 1
        %s1210 = smul.addr %s1209, 32
        %s1211 = scalar_lea.vmem [#allocation10], %s1210
        // Predicated region
        $region53: #{tpu_custom_call.1} parent=39 // pred_check
          %p1212 = pneg %p161
        $region54: #{tpu_custom_call.1} parent=39 // pred_check_branch
          %1214 = sbr.rel (%p1212) target = $region56
        $region55: #{tpu_custom_call.1} parent=39 // pred_region
          %s1216 = ssub.s32 128, 128
          %1217 = vsyncadd %s1203, %s1216
          %s1218 = smul.addr %s28, 128
          %s1219 = scalar_lea.hbm %s5, %s1218
          %s1221 = sshll.u32 %s1206, 4
          %s1222 = int_to_ptr.vmem [resolvable:$true] %s1221
          %1224 = dma.vmem_to_hbm [thread:$0]  %s1222, 128, %s1219, %s1203
        $region56: #{tpu_custom_call.1} parent=39 // pred_fallthru
          _
        // Predicated region
        $region57: #{tpu_custom_call.1} parent=39 // pred_check
          %p1225 = pneg %p187
        $region58: #{tpu_custom_call.1} parent=39 // pred_check_branch
          %1227 = sbr.rel (%p1225) target = $region60
        $region59: #{tpu_custom_call.1} parent=39 // pred_region
          %s1229 = ssub.s32 512, 512
          %1230 = vsyncadd %s1208, %s1229
          %s1231 = smul.addr %s28, 4
          %s1232 = smul.addr %s1231, 128
          %s1233 = scalar_lea.hbm %s6, %s1232
          %s1234 = sshll.u32 %s1211, 4
          %s1235 = int_to_ptr.vmem [resolvable:$true] %s1234
          %1240 = dma.vmem_to_hbm [thread:$0]  %s1235, 512, %s1233, %s1208, 128, 128, 8
        $region60: #{tpu_custom_call.1} parent=39 // pred_fallthru
          _
      $region40: #{tpu_custom_call.1} parent=5 // pred_fallthru
        _
      %p1241 = scmp.le.s32.totalorder 2, %s23
      // Predicated region
      $region61: #{tpu_custom_call.1} parent=5 // pred_check
        %p1242 = pneg %p1241
      $region62: #{tpu_custom_call.1} parent=5 // pred_check_branch
        %1244 = sbr.rel (%p1242) target = $region64
      $region63: #{tpu_custom_call.1} parent=5 // pred_region
        %s1245 = ssub.s32 %s23, 2
        // Predicated region
        $region65: #{tpu_custom_call.1} parent=63 // pred_check
          %p1246 = pneg %p167
        $region66: #{tpu_custom_call.1} parent=63 // pred_check_branch
          %1248 = sbr.rel (%p1246) target = $region68
        $region67: #{tpu_custom_call.1} parent=63 // pred_region
          %s1249 = sand.u32 %s152, 1
          %s1250 = scalar_lea.sflag [#allocation5], %s1249
          %s1251 = sand.u32 %s152, 1
          %s1252 = smul.addr %s1251, 8
          %s1253 = scalar_lea.vmem [#allocation9], %s1252
          %1254 = dma.done %s1250, 128
        $region68: #{tpu_custom_call.1} parent=63 // pred_fallthru
          _
        // Predicated region
        $region69: #{tpu_custom_call.1} parent=63 // pred_check
          %p1255 = pneg %p193
        $region70: #{tpu_custom_call.1} parent=63 // pred_check_branch
          %1257 = sbr.rel (%p1255) target = $region72
        $region71: #{tpu_custom_call.1} parent=63 // pred_region
          %s1258 = sand.u32 %s178, 1
          %s1259 = scalar_lea.sflag [#allocation11], %s1258
          %s1260 = sand.u32 %s178, 1
          %s1261 = smul.addr %s1260, 32
          %s1262 = scalar_lea.vmem [#allocation10], %s1261
          %1263 = dma.done %s1259, 512
        $region72: #{tpu_custom_call.1} parent=63 // pred_fallthru
          _
      $region64: #{tpu_custom_call.1} parent=5 // pred_fallthru
        _
    $region6: #{tpu_custom_call.1} parent=1 // loop_footer
      %s27 = sadd.s32 1, %s23
    $region7: #{tpu_custom_call.1} parent=1 // loop_footer_branch
      %22 = sbr.rel target = $region3
    $region8: #{tpu_custom_call.1} parent=1 // loop_exit
      _
    %1264 = vsyncpa [#allocation4], 1
    %s1265 = scalar_lea.sflag [#allocation4], 1
    %1266 = vsyncpa %s1265, 1
    %1267 = vsyncpa [#allocation7], 1
    %1268 = vsyncpa [#allocation5], 1
    %s1269 = scalar_lea.sflag [#allocation5], 1
    %1270 = vsyncpa %s1269, 1
    %1271 = vsyncpa [#allocation11], 1
    %s1272 = scalar_lea.sflag [#allocation11], 1
    %1273 = vsyncpa %s1272, 1

</llo_original>
